<compile_context>
chip_gen: v5e
topology: v5e:2x2
jax: 0.10.0
libtpu: 0.0.40
codegen_flags: <defaults>
</compile_context>

<pallas_src>
import functools

import jax
import jax.numpy as jnp
from jax.experimental import pallas as pl
from jax.experimental.pallas import tpu as pltpu

NEG = -1e30


# ---------------------------------------------------------------------------
# Fused kernel: one grid step == one image (CPE + Grapher + head).
# ---------------------------------------------------------------------------
def combined2_kernel(xpad_ref, colmask_ref, wdw_ref, bdw_ref,
                     w1t_ref, b1_ref, wmat_ref, wmbt_ref, bmr_ref,
                     w2t_ref, b2_ref, wl_ref, blh_ref, o_ref, lg_ref,
                     *, k, W, P, C):
    f32 = jnp.float32
    NP, Cp = xpad_ref.shape                       # channel dim padded to a lane multiple
    N = NP - 2 * P                                # number of graph nodes = H*W
    ncls = wl_ref.shape[0]
    H = N // W

    def mm(a, b):                                 # a[m,k] @ b[k,n], f32 accumulation
        return jax.lax.dot_general(a, b, (((1,), (0,)), ((), ())),
                                   preferred_element_type=f32)

    # ---------------- CPE: x + depthwise 3x3 conv(x) ----------------
    # xpad is the channel-last node list zero-padded by P = W+1 nodes per side, so
    # every tap is one static slice; taps are grouped per column offset so only the
    # two horizontal wrap-around masks are applied (2 multiplies instead of 6).
    def tap(oh, ow):
        t = (oh + 1) * 3 + (ow + 1)
        s = P + oh * W + ow
        return xpad_ref[s:s + N, :] * wdw_ref[t:t + 1, :]

    mask_l = colmask_ref[:, 0:1]                  # 1.0 where a left  neighbour exists
    mask_r = colmask_ref[:, 1:2]                  # 1.0 where a right neighbour exists
    center = tap(-1, 0) + tap(0, 0) + tap(1, 0)
    left   = (tap(-1, -1) + tap(0, -1) + tap(1, -1)) * mask_l
    right  = (tap(-1,  1) + tap(0,  1) + tap(1,  1)) * mask_r
    x1 = xpad_ref[P:P + N, :] + bdw_ref[...] + center + left + right          # [N, Cp]

    # ---------------- Grapher: fc1 -> kNN MRConv -> fc2 -> residual ----------------
    y = mm(x1, w1t_ref[...]) + b1_ref[...]                                    # [N, Cp]

    # similarity S[i,j] = 2*y_i.y_j - ||y_j||^2  (row-constant -||y_i||^2 dropped)
    G = jax.lax.dot_general(y, y, (((1,), (1,)), ((), ())),
                            preferred_element_type=f32)                       # [N, N]
    yT = jnp.transpose(y)                                                     # [Cp, N]
    sqj = jnp.sum(yT * yT, axis=0, keepdims=True)                             # [1, N]
    S = 2.0 * G - sqj

    # exact top-k via k rounds of row-max; a tiny index bias breaks ties so every
    # round's hit mask is one-hot -> the neighbour gather is a single MXU matmul,
    # and the MRConv max is k-1 elementwise maxes.
    col_j = jax.lax.broadcasted_iota(jnp.int32, (N, N), 1)
    work = S - 1e-6 * col_j.astype(f32)
    nbr = None
    for r in range(k):
        kth = jnp.max(work, axis=1, keepdims=True)
        hit = work >= kth                                                     # one-hot rows
        feat = mm(hit.astype(f32), y)                                         # gather via MXU
        nbr = feat if nbr is None else jnp.maximum(nbr, feat)
        if r < k - 1:
            work = jnp.where(hit, NEG, work)
    agg = nbr - y                                                             # max-relative feats

    z = mm(y, wmat_ref[...]) + mm(agg, wmbt_ref[...]) + bmr_ref[...]          # [N, Hp]
    z = jax.nn.gelu(z, approximate=True)
    g = mm(z, w2t_ref[...]) + b2_ref[...] + x1                                # [N, Cp]

    # ---------------- head: per-H-row Linear over W + log_softmax over channels ----------------
    for h in range(H):                            # H tiny matmuls, no O(H^2) block-diag weight
        lg_ref[h * ncls:(h + 1) * ncls, :] = mm(wl_ref[...], g[h * W:(h + 1) * W, :])
    logits = lg_ref[...] + blh_ref[...]                                       # [H*ncls, Cp]

    lane = jax.lax.broadcasted_iota(jnp.int32, logits.shape, 1)
    ml = jnp.where(lane < C, logits, NEG)         # mask padded channel lanes out of softmax
    m = jnp.max(ml, axis=1, keepdims=True)
    lse = jnp.log(jnp.sum(jnp.exp(ml - m), axis=1, keepdims=True)) + m
    o_ref[...] = (ml - lse).astype(o_ref.dtype)   # one full lane-dense store


# ---------------------------------------------------------------------------
# Wrapper: layout / weight prep (cheap one-off XLA ops) + single pallas_call.
# ---------------------------------------------------------------------------
def combined_2_forward(x, p, *, k=4):
    B, C, H, W = x.shape
    ncls, w_in = p["wl"].shape
    assert w_in == W, "nn.Linear(in_channels,...) over the last NCHW dim needs W == in_channels"
    N = H * W
    P = W + 1
    dt = x.dtype
    f32 = jnp.float32
    Cp = ((C + 127) // 128) * 128                 # channel lanes padded -> lane-dense tensors
    Hp = ((2 * C + 127) // 128) * 128             # MRConv hidden (2C) lanes padded

    # NCHW -> channel-last node list, node-padded by P each side and channel-padded to Cp.
    xn = jnp.transpose(x, (0, 2, 3, 1)).reshape(B, N, C)
    xpad = jnp.pad(xn, ((0, 0), (P, P), (0, Cp - C)))                         # [B, N+2P, Cp]

    col = jnp.arange(N) % W
    colmask = jnp.stack([(col > 0), (col < W - 1)], axis=1).astype(f32)       # [N, 2]

    def pad2(a, r, c):
        a = a.astype(f32)
        return jnp.pad(a, ((0, r - a.shape[0]), (0, c - a.shape[1])))

    wdw9 = pad2(jnp.transpose(p["w_dw"].reshape(C, 9)), 9, Cp)                # [9, Cp]
    bdw  = pad2(p["b_dw"].reshape(1, C), 1, Cp)
    w1t  = pad2(jnp.transpose(p["w1"]), Cp, Cp)
    b1   = pad2(p["b1"].reshape(1, C), 1, Cp)
    wmat = pad2(jnp.transpose(p["wmr"][:, :C]), Cp, Hp)                       # y-branch of MRConv fc
    wmbt = pad2(jnp.transpose(p["wmr"][:, C:]), Cp, Hp)                       # agg-branch
    bmr  = pad2(p["bmr"].reshape(1, 2 * C), 1, Hp)
    w2t  = pad2(jnp.transpose(p["w2"]), Hp, Cp)
    b2   = pad2(p["b2"].reshape(1, C), 1, Cp)
    wl   = p["wl"].astype(f32)                                                # [ncls, W] (kept f32)
    blh  = jnp.tile(p["bl"].astype(f32), H).reshape(H * ncls, 1)              # [H*ncls, 1]

    def full2(shape):
        return pl.BlockSpec(shape, lambda b: (0, 0))

    out = pl.pallas_call(
        functools.partial(combined2_kernel, k=k, W=W, P=P, C=C),
        out_shape=jax.ShapeDtypeStruct((B, H * ncls, Cp), dt),
        grid=(B,),
        in_specs=[
            pl.BlockSpec((None, N + 2 * P, Cp), lambda b: (b, 0, 0)),
            full2((N, 2)),
            full2((9, Cp)), full2((1, Cp)),
            full2((Cp, Cp)), full2((1, Cp)),
            full2((Cp, Hp)), full2((Cp, Hp)), full2((1, Hp)),
            full2((Hp, Cp)), full2((1, Cp)),
            full2((ncls, W)), full2((H * ncls, 1)),
        ],
        out_specs=pl.BlockSpec((None, H * ncls, Cp), lambda b: (b, 0, 0)),
        scratch_shapes=[pltpu.VMEM((H * ncls, Cp), jnp.float32)],
        compiler_params=pltpu.CompilerParams(
            dimension_semantics=("parallel",),      # >= 2 parallel steps -> both v7x TCs busy
            vmem_limit_bytes=32 * 1024 * 1024),     # explicit; raise / tile [N,N] for large N
    )(xpad, colmask, wdw9, bdw, w1t, b1, wmat, wmbt, bmr, w2t, b2, wl, blh)

    # [B, H*ncls, Cp] -> slice real channels -> [B, C, H, ncls]
    out = out[:, :, :C]
    return jnp.transpose(out.reshape(B, H, ncls, C), (0, 3, 1, 2))


# ---------------------------------------------------------------------------
# Pure-JAX reference of the same forward pass (NCHW, direct port).
# ---------------------------------------------------------------------------
def reference_forward(x, p, *, k=4):
    B, C, H, W = x.shape
    N = H * W
    with jax.default_matmul_precision("float32"):
        xpad = jnp.pad(x, ((0, 0), (0, 0), (1, 1), (1, 1)))
        conv = jnp.zeros_like(x) + p["b_dw"].reshape(1, C, 1, 1)
        for dh in range(3):
            for dw in range(3):
                conv = conv + xpad[:, :, dh:dh + H, dw:dw + W] * p["w_dw"][:, dh, dw].reshape(1, C, 1, 1)
        x1 = x + conv

        y0 = jnp.transpose(x1, (0, 2, 3, 1)).reshape(B, N, C)
        y = y0 @ p["w1"].T + p["b1"]
        G = jnp.einsum('bic,bjc->bij', y, y)
        sqj = jnp.sum(y * y, axis=-1)[:, None, :]
        S = 2.0 * G - sqj
        # exact top-k with the same tiny index tie-break as the kernel
        work = S - 1e-6 * jnp.arange(N, dtype=S.dtype)[None, None, :]
        sel = jnp.zeros(S.shape, dtype=bool)
        for _ in range(k):
            kth = jnp.max(work, axis=-1, keepdims=True)
            hit = work >= kth
            sel = sel | hit
            work = jnp.where(hit, NEG, work)
        nb = jnp.where(sel[..., None], y[:, None, :, :], NEG)
        agg = jnp.max(nb, axis=2) - y
        z = jnp.concatenate([y, agg], axis=-1) @ p["wmr"].T + p["bmr"]
        z = jax.nn.gelu(z, approximate=True)
        g = z @ p["w2"].T + p["b2"] + y0

        x2 = jnp.transpose(g.reshape(B, H, W, C), (0, 3, 1, 2))               # [B, C, H, W]
        logits = jnp.einsum('bchw,nw->bchn', x2, p["wl"]) + p["bl"].reshape(1, 1, 1, -1)
        return jax.nn.log_softmax(logits, axis=1)


if __name__ == "__main__":
    # NOTE: the PyTorch forward applies nn.Linear(in_channels, num_classes) to an
    # NCHW tensor, so the last spatial dim W must equal in_channels (= 3).
    B, C, H, W = 2, 3, 8, 3
    num_classes = 2
    k = 4

    key = jax.random.PRNGKey(0)
    ks = jax.random.split(key, 12)
    p = {
        "w_dw": 0.2 * jax.random.normal(ks[0], (C, 3, 3), jnp.float32),
        "b_dw": 0.1 * jax.random.normal(ks[1], (C,), jnp.float32),
        "w1":   0.3 * jax.random.normal(ks[2], (C, C), jnp.float32),
        "b1":   0.1 * jax.random.normal(ks[3], (C,), jnp.float32),
        "wmr":  0.3 * jax.random.normal(ks[4], (2 * C, 2 * C), jnp.float32),
        "bmr":  0.1 * jax.random.normal(ks[5], (2 * C,), jnp.float32),
        "w2":   0.3 * jax.random.normal(ks[6], (C, 2 * C), jnp.float32),
        "b2":   0.1 * jax.random.normal(ks[7], (C,), jnp.float32),
        "wl":   0.3 * jax.random.normal(ks[8], (num_classes, C), jnp.float32),
        "bl":   0.1 * jax.random.normal(ks[9], (num_classes,), jnp.float32),
    }
    x = jax.random.normal(ks[10], (B, C, H, W), jnp.float32)

    out = jax.block_until_ready(combined_2_forward(x, p, k=k))

    assert out.shape == (B, C, H, num_classes), out.shape
    assert bool(jnp.all(jnp.isfinite(out)))
    # rows of log-probabilities over dim=1 should exp-sum to 1
    s = jnp.sum(jnp.exp(out), axis=1)
    assert bool(jnp.all(jnp.abs(s - 1.0) < 1e-4))

    # check against the pure-JAX reference
    ref = jax.block_until_ready(reference_forward(x, p, k=k))
    assert bool(jnp.all(jnp.abs(out - ref) < 1e-2)), float(jnp.max(jnp.abs(out - ref)))

    print("KERNEL_OK")
</pallas_src>

<mosaic_0001>
module attributes {stable_mosaic.version = 11 : i64} {
  func.func @combined2_kernel(%arg0: i32, %arg1: memref<1x32x128xf32, #tpu.memory_space<vmem>>, %arg2: memref<24x2xf32, #tpu.memory_space<vmem>>, %arg3: memref<9x128xf32, #tpu.memory_space<vmem>>, %arg4: memref<1x128xf32, #tpu.memory_space<vmem>>, %arg5: memref<128x128xf32, #tpu.memory_space<vmem>>, %arg6: memref<1x128xf32, #tpu.memory_space<vmem>>, %arg7: memref<128x128xf32, #tpu.memory_space<vmem>>, %arg8: memref<128x128xf32, #tpu.memory_space<vmem>>, %arg9: memref<1x128xf32, #tpu.memory_space<vmem>>, %arg10: memref<128x128xf32, #tpu.memory_space<vmem>>, %arg11: memref<1x128xf32, #tpu.memory_space<vmem>>, %arg12: memref<2x3xf32, #tpu.memory_space<vmem>>, %arg13: memref<16x1xf32, #tpu.memory_space<vmem>>, %arg14: memref<1x16x128xf32, #tpu.memory_space<vmem>>, %arg15: memref<16x128xf32, #tpu.memory_space<vmem>>) attributes {dimension_semantics = [#tpu.dimension_semantics<parallel>], iteration_bounds = array<i64: 2>, scalar_prefetch = 0 : i64, scratch_operands = 1 : i64, tpu.core_type = #tpu.core_type<tc>, window_params = [{transform_indices = @transform_0, window_bounds = array<i64: 1, 32, 128>}, {pipeline_mode = #tpu.pipeline_mode<synchronous>, transform_indices = @transform_1, window_bounds = array<i64: 24, 2>}, {pipeline_mode = #tpu.pipeline_mode<synchronous>, transform_indices = @transform_2, window_bounds = array<i64: 9, 128>}, {pipeline_mode = #tpu.pipeline_mode<synchronous>, transform_indices = @transform_3, window_bounds = array<i64: 1, 128>}, {pipeline_mode = #tpu.pipeline_mode<synchronous>, transform_indices = @transform_4, window_bounds = array<i64: 128, 128>}, {pipeline_mode = #tpu.pipeline_mode<synchronous>, transform_indices = @transform_5, window_bounds = array<i64: 1, 128>}, {pipeline_mode = #tpu.pipeline_mode<synchronous>, transform_indices = @transform_6, window_bounds = array<i64: 128, 128>}, {pipeline_mode = #tpu.pipeline_mode<synchronous>, transform_indices = @transform_7, window_bounds = array<i64: 128, 128>}, {pipeline_mode = #tpu.pipeline_mode<synchronous>, transform_indices = @transform_8, window_bounds = array<i64: 1, 128>}, {pipeline_mode = #tpu.pipeline_mode<synchronous>, transform_indices = @transform_9, window_bounds = array<i64: 128, 128>}, {pipeline_mode = #tpu.pipeline_mode<synchronous>, transform_indices = @transform_10, window_bounds = array<i64: 1, 128>}, {pipeline_mode = #tpu.pipeline_mode<synchronous>, transform_indices = @transform_11, window_bounds = array<i64: 2, 3>}, {pipeline_mode = #tpu.pipeline_mode<synchronous>, transform_indices = @transform_12, window_bounds = array<i64: 16, 1>}, {transform_indices = @transform_13, window_bounds = array<i64: 1, 16, 128>}]} {
    %c0 = arith.constant 0 : index
    %c0_0 = arith.constant 0 : index
    %0 = vector.load %arg2[%c0, %c0_0] : memref<24x2xf32, #tpu.memory_space<vmem>>, vector<24x1xf32>
    %c0_1 = arith.constant 0 : index
    %c1 = arith.constant 1 : index
    %1 = vector.load %arg2[%c0_1, %c1] : memref<24x2xf32, #tpu.memory_space<vmem>>, vector<24x1xf32>
    %c0_2 = arith.constant 0 : index
    %c1_3 = arith.constant 1 : index
    %c0_4 = arith.constant 0 : index
    %2 = vector.load %arg1[%c0_2, %c1_3, %c0_4] : memref<1x32x128xf32, #tpu.memory_space<vmem>>, vector<1x24x128xf32>
    %3 = vector.shape_cast %2 : vector<1x24x128xf32> to vector<24x128xf32>
    %c1_5 = arith.constant 1 : index
    %c0_6 = arith.constant 0 : index
    %4 = vector.load %arg3[%c1_5, %c0_6] : memref<9x128xf32, #tpu.memory_space<vmem>>, vector<1x128xf32>
    %5 = vector.broadcast %4 : vector<1x128xf32> to vector<24x128xf32>
    %6 = arith.mulf %3, %5 : vector<24x128xf32>
    %c0_7 = arith.constant 0 : index
    %c4 = arith.constant 4 : index
    %c0_8 = arith.constant 0 : index
    %7 = vector.load %arg1[%c0_7, %c4, %c0_8] : memref<1x32x128xf32, #tpu.memory_space<vmem>>, vector<1x24x128xf32>
    %8 = vector.shape_cast %7 : vector<1x24x128xf32> to vector<24x128xf32>
    %c4_9 = arith.constant 4 : index
    %c0_10 = arith.constant 0 : index
    %9 = vector.load %arg3[%c4_9, %c0_10] : memref<9x128xf32, #tpu.memory_space<vmem>>, vector<1x128xf32>
    %10 = vector.broadcast %9 : vector<1x128xf32> to vector<24x128xf32>
    %11 = arith.mulf %8, %10 : vector<24x128xf32>
    %12 = arith.addf %6, %11 : vector<24x128xf32>
    %c0_11 = arith.constant 0 : index
    %c7 = arith.constant 7 : index
    %c0_12 = arith.constant 0 : index
    %13 = vector.load %arg1[%c0_11, %c7, %c0_12] : memref<1x32x128xf32, #tpu.memory_space<vmem>>, vector<1x24x128xf32>
    %14 = vector.shape_cast %13 : vector<1x24x128xf32> to vector<24x128xf32>
    %c7_13 = arith.constant 7 : index
    %c0_14 = arith.constant 0 : index
    %15 = vector.load %arg3[%c7_13, %c0_14] : memref<9x128xf32, #tpu.memory_space<vmem>>, vector<1x128xf32>
    %16 = vector.broadcast %15 : vector<1x128xf32> to vector<24x128xf32>
    %17 = arith.mulf %14, %16 : vector<24x128xf32>
    %18 = arith.addf %12, %17 : vector<24x128xf32>
    %c0_15 = arith.constant 0 : index
    %c0_16 = arith.constant 0 : index
    %c0_17 = arith.constant 0 : index
    %19 = vector.load %arg1[%c0_15, %c0_16, %c0_17] : memref<1x32x128xf32, #tpu.memory_space<vmem>>, vector<1x24x128xf32>
    %20 = vector.shape_cast %19 : vector<1x24x128xf32> to vector<24x128xf32>
    %c0_18 = arith.constant 0 : index
    %c0_19 = arith.constant 0 : index
    %21 = vector.load %arg3[%c0_18, %c0_19] : memref<9x128xf32, #tpu.memory_space<vmem>>, vector<1x128xf32>
    %22 = vector.broadcast %21 : vector<1x128xf32> to vector<24x128xf32>
    %23 = arith.mulf %20, %22 : vector<24x128xf32>
    %c0_20 = arith.constant 0 : index
    %c3 = arith.constant 3 : index
    %c0_21 = arith.constant 0 : index
    %24 = vector.load %arg1[%c0_20, %c3, %c0_21] : memref<1x32x128xf32, #tpu.memory_space<vmem>>, vector<1x24x128xf32>
    %25 = vector.shape_cast %24 : vector<1x24x128xf32> to vector<24x128xf32>
    %c3_22 = arith.constant 3 : index
    %c0_23 = arith.constant 0 : index
    %26 = vector.load %arg3[%c3_22, %c0_23] : memref<9x128xf32, #tpu.memory_space<vmem>>, vector<1x128xf32>
    %27 = vector.broadcast %26 : vector<1x128xf32> to vector<24x128xf32>
    %28 = arith.mulf %25, %27 : vector<24x128xf32>
    %29 = arith.addf %23, %28 : vector<24x128xf32>
    %c0_24 = arith.constant 0 : index
    %c6 = arith.constant 6 : index
    %c0_25 = arith.constant 0 : index
    %30 = vector.load %arg1[%c0_24, %c6, %c0_25] : memref<1x32x128xf32, #tpu.memory_space<vmem>>, vector<1x24x128xf32>
    %31 = vector.shape_cast %30 : vector<1x24x128xf32> to vector<24x128xf32>
    %c6_26 = arith.constant 6 : index
    %c0_27 = arith.constant 0 : index
    %32 = vector.load %arg3[%c6_26, %c0_27] : memref<9x128xf32, #tpu.memory_space<vmem>>, vector<1x128xf32>
    %33 = vector.broadcast %32 : vector<1x128xf32> to vector<24x128xf32>
    %34 = arith.mulf %31, %33 : vector<24x128xf32>
    %35 = arith.addf %29, %34 : vector<24x128xf32>
    %36 = vector.broadcast %0 : vector<24x1xf32> to vector<24x128xf32>
    %37 = arith.mulf %35, %36 : vector<24x128xf32>
    %c0_28 = arith.constant 0 : index
    %c2 = arith.constant 2 : index
    %c0_29 = arith.constant 0 : index
    %38 = vector.load %arg1[%c0_28, %c2, %c0_29] : memref<1x32x128xf32, #tpu.memory_space<vmem>>, vector<1x24x128xf32>
    %39 = vector.shape_cast %38 : vector<1x24x128xf32> to vector<24x128xf32>
    %c2_30 = arith.constant 2 : index
    %c0_31 = arith.constant 0 : index
    %40 = vector.load %arg3[%c2_30, %c0_31] : memref<9x128xf32, #tpu.memory_space<vmem>>, vector<1x128xf32>
    %41 = vector.broadcast %40 : vector<1x128xf32> to vector<24x128xf32>
    %42 = arith.mulf %39, %41 : vector<24x128xf32>
    %c0_32 = arith.constant 0 : index
    %c5 = arith.constant 5 : index
    %c0_33 = arith.constant 0 : index
    %43 = vector.load %arg1[%c0_32, %c5, %c0_33] : memref<1x32x128xf32, #tpu.memory_space<vmem>>, vector<1x24x128xf32>
    %44 = vector.shape_cast %43 : vector<1x24x128xf32> to vector<24x128xf32>
    %c5_34 = arith.constant 5 : index
    %c0_35 = arith.constant 0 : index
    %45 = vector.load %arg3[%c5_34, %c0_35] : memref<9x128xf32, #tpu.memory_space<vmem>>, vector<1x128xf32>
    %46 = vector.broadcast %45 : vector<1x128xf32> to vector<24x128xf32>
    %47 = arith.mulf %44, %46 : vector<24x128xf32>
    %48 = arith.addf %42, %47 : vector<24x128xf32>
    %c0_36 = arith.constant 0 : index
    %c8 = arith.constant 8 : index
    %c0_37 = arith.constant 0 : index
    %49 = vector.load %arg1[%c0_36, %c8, %c0_37] : memref<1x32x128xf32, #tpu.memory_space<vmem>>, vector<1x24x128xf32>
    %50 = vector.shape_cast %49 : vector<1x24x128xf32> to vector<24x128xf32>
    %c8_38 = arith.constant 8 : index
    %c0_39 = arith.constant 0 : index
    %51 = vector.load %arg3[%c8_38, %c0_39] : memref<9x128xf32, #tpu.memory_space<vmem>>, vector<1x128xf32>
    %52 = vector.broadcast %51 : vector<1x128xf32> to vector<24x128xf32>
    %53 = arith.mulf %50, %52 : vector<24x128xf32>
    %54 = arith.addf %48, %53 : vector<24x128xf32>
    %55 = vector.broadcast %1 : vector<24x1xf32> to vector<24x128xf32>
    %56 = arith.mulf %54, %55 : vector<24x128xf32>
    %c0_40 = arith.constant 0 : index
    %c4_41 = arith.constant 4 : index
    %c0_42 = arith.constant 0 : index
    %57 = vector.load %arg1[%c0_40, %c4_41, %c0_42] : memref<1x32x128xf32, #tpu.memory_space<vmem>>, vector<1x24x128xf32>
    %58 = vector.shape_cast %57 : vector<1x24x128xf32> to vector<24x128xf32>
    %c0_43 = arith.constant 0 : index
    %c0_44 = arith.constant 0 : index
    %59 = vector.load %arg4[%c0_43, %c0_44] : memref<1x128xf32, #tpu.memory_space<vmem>>, vector<1x128xf32>
    %60 = vector.broadcast %59 : vector<1x128xf32> to vector<24x128xf32>
    %61 = arith.addf %58, %60 : vector<24x128xf32>
    %62 = arith.addf %61, %18 : vector<24x128xf32>
    %63 = arith.addf %62, %37 : vector<24x128xf32>
    %64 = arith.addf %63, %56 : vector<24x128xf32>
    %c0_45 = arith.constant 0 : index
    %c0_46 = arith.constant 0 : index
    %65 = vector.load %arg5[%c0_45, %c0_46] : memref<128x128xf32, #tpu.memory_space<vmem>>, vector<128x128xf32>
    %cst = arith.constant dense<0.000000e+00> : vector<24x128xf32>
    %66 = tpu.matmul %64, %65, %cst {dimension_numbers = #tpu.dot_dimension_numbers<[1], [0], [0], [1], [0, 0, 1, 1], [], []>} : vector<24x128xf32>, vector<128x128xf32>, vector<24x128xf32> -> vector<24x128xf32>
    %c0_47 = arith.constant 0 : index
    %c0_48 = arith.constant 0 : index
    %67 = vector.load %arg6[%c0_47, %c0_48] : memref<1x128xf32, #tpu.memory_space<vmem>>, vector<1x128xf32>
    %68 = vector.broadcast %67 : vector<1x128xf32> to vector<24x128xf32>
    %69 = arith.addf %66, %68 : vector<24x128xf32>
    %cst_49 = arith.constant dense<0.000000e+00> : vector<24x24xf32>
    %70 = tpu.matmul %69, %69, %cst_49 {dimension_numbers = #tpu.dot_dimension_numbers<[1], [1], [0], [0], [0, 0, 1, 0], [], []>} : vector<24x128xf32>, vector<24x128xf32>, vector<24x24xf32> -> vector<24x24xf32>
    %71 = tpu.transpose %69, [1, 0] : vector<24x128xf32> -> vector<128x24xf32>
    %72 = arith.mulf %71, %71 : vector<128x24xf32>
    %cst_50 = arith.constant dense<0.000000e+00> : vector<24xf32>
    %73 = vector.multi_reduction <add>, %72, %cst_50 [0] : vector<128x24xf32> to vector<24xf32>
    %74 = vector.shape_cast %73 : vector<24xf32> to vector<1x24xf32>
    %cst_51 = arith.constant 2.000000e+00 : f32
    %75 = vector.broadcast %cst_51 : f32 to vector<24x24xf32>
    %76 = arith.mulf %75, %70 : vector<24x24xf32>
    %77 = vector.broadcast %74 : vector<1x24xf32> to vector<24x24xf32>
    %78 = arith.subf %76, %77 : vector<24x24xf32>
    %79 = tpu.iota {dimensions = array<i32: 1>} : vector<24x24xi32>
    %80 = arith.sitofp %79 : vector<24x24xi32> to vector<24x24xf32>
    %cst_52 = arith.constant 9.99999997E-7 : f32
    %81 = vector.broadcast %cst_52 : f32 to vector<24x24xf32>
    %82 = arith.mulf %81, %80 : vector<24x24xf32>
    %83 = arith.subf %78, %82 : vector<24x24xf32>
    %cst_53 = arith.constant dense<0xFF800000> : vector<24xf32>
    %84 = vector.multi_reduction <maximumf>, %83, %cst_53 [1] : vector<24x24xf32> to vector<24xf32>
    %85 = vector.shape_cast %84 : vector<24xf32> to vector<24x1xf32>
    %86 = vector.broadcast %85 : vector<24x1xf32> to vector<24x24xf32>
    %87 = arith.cmpf oge, %83, %86 : vector<24x24xf32>
    %88 = arith.extui %87 : vector<24x24xi1> to vector<24x24xi32>
    %89 = arith.sitofp %88 : vector<24x24xi32> to vector<24x24xf32>
    %cst_54 = arith.constant dense<0.000000e+00> : vector<24x128xf32>
    %90 = tpu.matmul %89, %69, %cst_54 {dimension_numbers = #tpu.dot_dimension_numbers<[1], [0], [0], [1], [0, 0, 1, 1], [], []>} : vector<24x24xf32>, vector<24x128xf32>, vector<24x128xf32> -> vector<24x128xf32>
    %cst_55 = arith.constant -1.000000e+30 : f32
    %91 = vector.broadcast %cst_55 : f32 to vector<24x24xf32>
    %92 = arith.select %87, %91, %83 : vector<24x24xi1>, vector<24x24xf32>
    %cst_56 = arith.constant dense<0xFF800000> : vector<24xf32>
    %93 = vector.multi_reduction <maximumf>, %92, %cst_56 [1] : vector<24x24xf32> to vector<24xf32>
    %94 = vector.shape_cast %93 : vector<24xf32> to vector<24x1xf32>
    %95 = vector.broadcast %94 : vector<24x1xf32> to vector<24x24xf32>
    %96 = arith.cmpf oge, %92, %95 : vector<24x24xf32>
    %97 = arith.extui %96 : vector<24x24xi1> to vector<24x24xi32>
    %98 = arith.sitofp %97 : vector<24x24xi32> to vector<24x24xf32>
    %cst_57 = arith.constant dense<0.000000e+00> : vector<24x128xf32>
    %99 = tpu.matmul %98, %69, %cst_57 {dimension_numbers = #tpu.dot_dimension_numbers<[1], [0], [0], [1], [0, 0, 1, 1], [], []>} : vector<24x24xf32>, vector<24x128xf32>, vector<24x128xf32> -> vector<24x128xf32>
    %100 = arith.maximumf %90, %99 : vector<24x128xf32>
    %cst_58 = arith.constant -1.000000e+30 : f32
    %101 = vector.broadcast %cst_58 : f32 to vector<24x24xf32>
    %102 = arith.select %96, %101, %92 : vector<24x24xi1>, vector<24x24xf32>
    %cst_59 = arith.constant dense<0xFF800000> : vector<24xf32>
    %103 = vector.multi_reduction <maximumf>, %102, %cst_59 [1] : vector<24x24xf32> to vector<24xf32>
    %104 = vector.shape_cast %103 : vector<24xf32> to vector<24x1xf32>
    %105 = vector.broadcast %104 : vector<24x1xf32> to vector<24x24xf32>
    %106 = arith.cmpf oge, %102, %105 : vector<24x24xf32>
    %107 = arith.extui %106 : vector<24x24xi1> to vector<24x24xi32>
    %108 = arith.sitofp %107 : vector<24x24xi32> to vector<24x24xf32>
    %cst_60 = arith.constant dense<0.000000e+00> : vector<24x128xf32>
    %109 = tpu.matmul %108, %69, %cst_60 {dimension_numbers = #tpu.dot_dimension_numbers<[1], [0], [0], [1], [0, 0, 1, 1], [], []>} : vector<24x24xf32>, vector<24x128xf32>, vector<24x128xf32> -> vector<24x128xf32>
    %110 = arith.maximumf %100, %109 : vector<24x128xf32>
    %cst_61 = arith.constant -1.000000e+30 : f32
    %111 = vector.broadcast %cst_61 : f32 to vector<24x24xf32>
    %112 = arith.select %106, %111, %102 : vector<24x24xi1>, vector<24x24xf32>
    %cst_62 = arith.constant dense<0xFF800000> : vector<24xf32>
    %113 = vector.multi_reduction <maximumf>, %112, %cst_62 [1] : vector<24x24xf32> to vector<24xf32>
    %114 = vector.shape_cast %113 : vector<24xf32> to vector<24x1xf32>
    %115 = vector.broadcast %114 : vector<24x1xf32> to vector<24x24xf32>
    %116 = arith.cmpf oge, %112, %115 : vector<24x24xf32>
    %117 = arith.extui %116 : vector<24x24xi1> to vector<24x24xi32>
    %118 = arith.sitofp %117 : vector<24x24xi32> to vector<24x24xf32>
    %cst_63 = arith.constant dense<0.000000e+00> : vector<24x128xf32>
    %119 = tpu.matmul %118, %69, %cst_63 {dimension_numbers = #tpu.dot_dimension_numbers<[1], [0], [0], [1], [0, 0, 1, 1], [], []>} : vector<24x24xf32>, vector<24x128xf32>, vector<24x128xf32> -> vector<24x128xf32>
    %120 = arith.maximumf %110, %119 : vector<24x128xf32>
    %121 = arith.subf %120, %69 : vector<24x128xf32>
    %c0_64 = arith.constant 0 : index
    %c0_65 = arith.constant 0 : index
    %122 = vector.load %arg7[%c0_64, %c0_65] : memref<128x128xf32, #tpu.memory_space<vmem>>, vector<128x128xf32>
    %cst_66 = arith.constant dense<0.000000e+00> : vector<24x128xf32>
    %123 = tpu.matmul %69, %122, %cst_66 {dimension_numbers = #tpu.dot_dimension_numbers<[1], [0], [0], [1], [0, 0, 1, 1], [], []>} : vector<24x128xf32>, vector<128x128xf32>, vector<24x128xf32> -> vector<24x128xf32>
    %c0_67 = arith.constant 0 : index
    %c0_68 = arith.constant 0 : index
    %124 = vector.load %arg8[%c0_67, %c0_68] : memref<128x128xf32, #tpu.memory_space<vmem>>, vector<128x128xf32>
    %cst_69 = arith.constant dense<0.000000e+00> : vector<24x128xf32>
    %125 = tpu.matmul %121, %124, %cst_69 {dimension_numbers = #tpu.dot_dimension_numbers<[1], [0], [0], [1], [0, 0, 1, 1], [], []>} : vector<24x128xf32>, vector<128x128xf32>, vector<24x128xf32> -> vector<24x128xf32>
    %126 = arith.addf %123, %125 : vector<24x128xf32>
    %c0_70 = arith.constant 0 : index
    %c0_71 = arith.constant 0 : index
    %127 = vector.load %arg9[%c0_70, %c0_71] : memref<1x128xf32, #tpu.memory_space<vmem>>, vector<1x128xf32>
    %128 = vector.broadcast %127 : vector<1x128xf32> to vector<24x128xf32>
    %129 = arith.addf %126, %128 : vector<24x128xf32>
    %130 = arith.mulf %129, %129 : vector<24x128xf32>
    %131 = arith.mulf %129, %130 : vector<24x128xf32>
    %cst_72 = arith.constant 4.471500e-02 : f32
    %132 = vector.broadcast %cst_72 : f32 to vector<24x128xf32>
    %133 = arith.mulf %132, %131 : vector<24x128xf32>
    %134 = arith.addf %129, %133 : vector<24x128xf32>
    %cst_73 = arith.constant 0.797884583 : f32
    %135 = vector.broadcast %cst_73 : f32 to vector<24x128xf32>
    %136 = arith.mulf %135, %134 : vector<24x128xf32>
    %137 = math.tanh %136 : vector<24x128xf32>
    %cst_74 = arith.constant 1.000000e+00 : f32
    %138 = vector.broadcast %cst_74 : f32 to vector<24x128xf32>
    %139 = arith.addf %138, %137 : vector<24x128xf32>
    %cst_75 = arith.constant 5.000000e-01 : f32
    %140 = vector.broadcast %cst_75 : f32 to vector<24x128xf32>
    %141 = arith.mulf %140, %139 : vector<24x128xf32>
    %142 = arith.mulf %129, %141 : vector<24x128xf32>
    %c0_76 = arith.constant 0 : index
    %c0_77 = arith.constant 0 : index
    %143 = vector.load %arg10[%c0_76, %c0_77] : memref<128x128xf32, #tpu.memory_space<vmem>>, vector<128x128xf32>
    %cst_78 = arith.constant dense<0.000000e+00> : vector<24x128xf32>
    %144 = tpu.matmul %142, %143, %cst_78 {dimension_numbers = #tpu.dot_dimension_numbers<[1], [0], [0], [1], [0, 0, 1, 1], [], []>} : vector<24x128xf32>, vector<128x128xf32>, vector<24x128xf32> -> vector<24x128xf32>
    %c0_79 = arith.constant 0 : index
    %c0_80 = arith.constant 0 : index
    %145 = vector.load %arg11[%c0_79, %c0_80] : memref<1x128xf32, #tpu.memory_space<vmem>>, vector<1x128xf32>
    %146 = vector.broadcast %145 : vector<1x128xf32> to vector<24x128xf32>
    %147 = arith.addf %144, %146 : vector<24x128xf32>
    %148 = arith.addf %147, %64 : vector<24x128xf32>
    %c0_81 = arith.constant 0 : index
    %c0_82 = arith.constant 0 : index
    %149 = vector.load %arg12[%c0_81, %c0_82] : memref<2x3xf32, #tpu.memory_space<vmem>>, vector<2x3xf32>
    %150 = vector.extract_strided_slice %148 {offsets = [0, 0], sizes = [3, 128], strides = [1, 1]} : vector<24x128xf32> to vector<3x128xf32>
    %cst_83 = arith.constant dense<0.000000e+00> : vector<2x128xf32>
    %151 = tpu.matmul %149, %150, %cst_83 {dimension_numbers = #tpu.dot_dimension_numbers<[1], [0], [0], [1], [0, 0, 1, 1], [], []>} : vector<2x3xf32>, vector<3x128xf32>, vector<2x128xf32> -> vector<2x128xf32>
    %c0_84 = arith.constant 0 : index
    %c0_85 = arith.constant 0 : index
    %152 = vector.load %arg15[%c0_84, %c0_85] : memref<16x128xf32, #tpu.memory_space<vmem>>, vector<2x128xf32>
    tpu.vector_store %arg15[%c0_84, %c0_85], %151 {strides = array<i32>} : memref<16x128xf32, #tpu.memory_space<vmem>>, vector<2x128xf32>,
    %c0_86 = arith.constant 0 : index
    %c0_87 = arith.constant 0 : index
    %153 = vector.load %arg12[%c0_86, %c0_87] : memref<2x3xf32, #tpu.memory_space<vmem>>, vector<2x3xf32>
    %154 = vector.extract_strided_slice %148 {offsets = [3, 0], sizes = [3, 128], strides = [1, 1]} : vector<24x128xf32> to vector<3x128xf32>
    %cst_88 = arith.constant dense<0.000000e+00> : vector<2x128xf32>
    %155 = tpu.matmul %153, %154, %cst_88 {dimension_numbers = #tpu.dot_dimension_numbers<[1], [0], [0], [1], [0, 0, 1, 1], [], []>} : vector<2x3xf32>, vector<3x128xf32>, vector<2x128xf32> -> vector<2x128xf32>
    %c2_89 = arith.constant 2 : index
    %c0_90 = arith.constant 0 : index
    %156 = vector.load %arg15[%c2_89, %c0_90] : memref<16x128xf32, #tpu.memory_space<vmem>>, vector<2x128xf32>
    tpu.vector_store %arg15[%c2_89, %c0_90], %155 {strides = array<i32>} : memref<16x128xf32, #tpu.memory_space<vmem>>, vector<2x128xf32>,
    %c0_91 = arith.constant 0 : index
    %c0_92 = arith.constant 0 : index
    %157 = vector.load %arg12[%c0_91, %c0_92] : memref<2x3xf32, #tpu.memory_space<vmem>>, vector<2x3xf32>
    %158 = vector.extract_strided_slice %148 {offsets = [6, 0], sizes = [3, 128], strides = [1, 1]} : vector<24x128xf32> to vector<3x128xf32>
    %cst_93 = arith.constant dense<0.000000e+00> : vector<2x128xf32>
    %159 = tpu.matmul %157, %158, %cst_93 {dimension_numbers = #tpu.dot_dimension_numbers<[1], [0], [0], [1], [0, 0, 1, 1], [], []>} : vector<2x3xf32>, vector<3x128xf32>, vector<2x128xf32> -> vector<2x128xf32>
    %c4_94 = arith.constant 4 : index
    %c0_95 = arith.constant 0 : index
    %160 = vector.load %arg15[%c4_94, %c0_95] : memref<16x128xf32, #tpu.memory_space<vmem>>, vector<2x128xf32>
    tpu.vector_store %arg15[%c4_94, %c0_95], %159 {strides = array<i32>} : memref<16x128xf32, #tpu.memory_space<vmem>>, vector<2x128xf32>,
    %c0_96 = arith.constant 0 : index
    %c0_97 = arith.constant 0 : index
    %161 = vector.load %arg12[%c0_96, %c0_97] : memref<2x3xf32, #tpu.memory_space<vmem>>, vector<2x3xf32>
    %162 = vector.extract_strided_slice %148 {offsets = [9, 0], sizes = [3, 128], strides = [1, 1]} : vector<24x128xf32> to vector<3x128xf32>
    %cst_98 = arith.constant dense<0.000000e+00> : vector<2x128xf32>
    %163 = tpu.matmul %161, %162, %cst_98 {dimension_numbers = #tpu.dot_dimension_numbers<[1], [0], [0], [1], [0, 0, 1, 1], [], []>} : vector<2x3xf32>, vector<3x128xf32>, vector<2x128xf32> -> vector<2x128xf32>
    %c6_99 = arith.constant 6 : index
    %c0_100 = arith.constant 0 : index
    %164 = vector.load %arg15[%c6_99, %c0_100] : memref<16x128xf32, #tpu.memory_space<vmem>>, vector<2x128xf32>
    tpu.vector_store %arg15[%c6_99, %c0_100], %163 {strides = array<i32>} : memref<16x128xf32, #tpu.memory_space<vmem>>, vector<2x128xf32>,
    %c0_101 = arith.constant 0 : index
    %c0_102 = arith.constant 0 : index
    %165 = vector.load %arg12[%c0_101, %c0_102] : memref<2x3xf32, #tpu.memory_space<vmem>>, vector<2x3xf32>
    %166 = vector.extract_strided_slice %148 {offsets = [12, 0], sizes = [3, 128], strides = [1, 1]} : vector<24x128xf32> to vector<3x128xf32>
    %cst_103 = arith.constant dense<0.000000e+00> : vector<2x128xf32>
    %167 = tpu.matmul %165, %166, %cst_103 {dimension_numbers = #tpu.dot_dimension_numbers<[1], [0], [0], [1], [0, 0, 1, 1], [], []>} : vector<2x3xf32>, vector<3x128xf32>, vector<2x128xf32> -> vector<2x128xf32>
    %c8_104 = arith.constant 8 : index
    %c0_105 = arith.constant 0 : index
    %168 = vector.load %arg15[%c8_104, %c0_105] : memref<16x128xf32, #tpu.memory_space<vmem>>, vector<2x128xf32>
    tpu.vector_store %arg15[%c8_104, %c0_105], %167 {strides = array<i32>} : memref<16x128xf32, #tpu.memory_space<vmem>>, vector<2x128xf32>,
    %c0_106 = arith.constant 0 : index
    %c0_107 = arith.constant 0 : index
    %169 = vector.load %arg12[%c0_106, %c0_107] : memref<2x3xf32, #tpu.memory_space<vmem>>, vector<2x3xf32>
    %170 = vector.extract_strided_slice %148 {offsets = [15, 0], sizes = [3, 128], strides = [1, 1]} : vector<24x128xf32> to vector<3x128xf32>
    %cst_108 = arith.constant dense<0.000000e+00> : vector<2x128xf32>
    %171 = tpu.matmul %169, %170, %cst_108 {dimension_numbers = #tpu.dot_dimension_numbers<[1], [0], [0], [1], [0, 0, 1, 1], [], []>} : vector<2x3xf32>, vector<3x128xf32>, vector<2x128xf32> -> vector<2x128xf32>
    %c10 = arith.constant 10 : index
    %c0_109 = arith.constant 0 : index
    %172 = vector.load %arg15[%c10, %c0_109] : memref<16x128xf32, #tpu.memory_space<vmem>>, vector<2x128xf32>
    tpu.vector_store %arg15[%c10, %c0_109], %171 {strides = array<i32>} : memref<16x128xf32, #tpu.memory_space<vmem>>, vector<2x128xf32>,
    %c0_110 = arith.constant 0 : index
    %c0_111 = arith.constant 0 : index
    %173 = vector.load %arg12[%c0_110, %c0_111] : memref<2x3xf32, #tpu.memory_space<vmem>>, vector<2x3xf32>
    %174 = vector.extract_strided_slice %148 {offsets = [18, 0], sizes = [3, 128], strides = [1, 1]} : vector<24x128xf32> to vector<3x128xf32>
    %cst_112 = arith.constant dense<0.000000e+00> : vector<2x128xf32>
    %175 = tpu.matmul %173, %174, %cst_112 {dimension_numbers = #tpu.dot_dimension_numbers<[1], [0], [0], [1], [0, 0, 1, 1], [], []>} : vector<2x3xf32>, vector<3x128xf32>, vector<2x128xf32> -> vector<2x128xf32>
    %c12 = arith.constant 12 : index
    %c0_113 = arith.constant 0 : index
    %176 = vector.load %arg15[%c12, %c0_113] : memref<16x128xf32, #tpu.memory_space<vmem>>, vector<2x128xf32>
    tpu.vector_store %arg15[%c12, %c0_113], %175 {strides = array<i32>} : memref<16x128xf32, #tpu.memory_space<vmem>>, vector<2x128xf32>,
    %c0_114 = arith.constant 0 : index
    %c0_115 = arith.constant 0 : index
    %177 = vector.load %arg12[%c0_114, %c0_115] : memref<2x3xf32, #tpu.memory_space<vmem>>, vector<2x3xf32>
    %178 = vector.extract_strided_slice %148 {offsets = [21, 0], sizes = [3, 128], strides = [1, 1]} : vector<24x128xf32> to vector<3x128xf32>
    %cst_116 = arith.constant dense<0.000000e+00> : vector<2x128xf32>
    %179 = tpu.matmul %177, %178, %cst_116 {dimension_numbers = #tpu.dot_dimension_numbers<[1], [0], [0], [1], [0, 0, 1, 1], [], []>} : vector<2x3xf32>, vector<3x128xf32>, vector<2x128xf32> -> vector<2x128xf32>
    %c14 = arith.constant 14 : index
    %c0_117 = arith.constant 0 : index
    %180 = vector.load %arg15[%c14, %c0_117] : memref<16x128xf32, #tpu.memory_space<vmem>>, vector<2x128xf32>
    tpu.vector_store %arg15[%c14, %c0_117], %179 {strides = array<i32>} : memref<16x128xf32, #tpu.memory_space<vmem>>, vector<2x128xf32>,
    %c0_118 = arith.constant 0 : index
    %c0_119 = arith.constant 0 : index
    %181 = vector.load %arg15[%c0_118, %c0_119] : memref<16x128xf32, #tpu.memory_space<vmem>>, vector<16x128xf32>
    %c0_120 = arith.constant 0 : index
    %c0_121 = arith.constant 0 : index
    %182 = vector.load %arg13[%c0_120, %c0_121] : memref<16x1xf32, #tpu.memory_space<vmem>>, vector<16x1xf32>
    %183 = vector.broadcast %182 : vector<16x1xf32> to vector<16x128xf32>
    %184 = arith.addf %181, %183 : vector<16x128xf32>
    %185 = tpu.iota {dimensions = array<i32: 1>} : vector<16x128xi32>
    %c3_i32 = arith.constant 3 : i32
    %186 = vector.broadcast %c3_i32 : i32 to vector<16x128xi32>
    %187 = arith.cmpi slt, %185, %186 : vector<16x128xi32>
    %cst_122 = arith.constant -1.000000e+30 : f32
    %188 = vector.broadcast %cst_122 : f32 to vector<16x128xf32>
    %189 = arith.select %187, %184, %188 : vector<16x128xi1>, vector<16x128xf32>
    %cst_123 = arith.constant dense<0xFF800000> : vector<16xf32>
    %190 = vector.multi_reduction <maximumf>, %189, %cst_123 [1] : vector<16x128xf32> to vector<16xf32>
    %191 = vector.shape_cast %190 : vector<16xf32> to vector<16x1xf32>
    %192 = vector.broadcast %191 : vector<16x1xf32> to vector<16x128xf32>
    %193 = arith.subf %189, %192 : vector<16x128xf32>
    %194 = math.exp %193 : vector<16x128xf32>
    %cst_124 = arith.constant dense<0.000000e+00> : vector<16xf32>
    %195 = vector.multi_reduction <add>, %194, %cst_124 [1] : vector<16x128xf32> to vector<16xf32>
    %196 = vector.shape_cast %195 : vector<16xf32> to vector<16x1xf32>
    %197 = math.log %196 : vector<16x1xf32>
    %198 = arith.addf %197, %191 : vector<16x1xf32>
    %199 = vector.broadcast %198 : vector<16x1xf32> to vector<16x128xf32>
    %200 = arith.subf %189, %199 : vector<16x128xf32>
    %c0_125 = arith.constant 0 : index
    %c0_126 = arith.constant 0 : index
    %c0_127 = arith.constant 0 : index
    %201 = vector.load %arg14[%c0_125, %c0_126, %c0_127] : memref<1x16x128xf32, #tpu.memory_space<vmem>>, vector<1x16x128xf32>
    %202 = vector.shape_cast %201 : vector<1x16x128xf32> to vector<16x128xf32>
    %203 = vector.shape_cast %200 : vector<16x128xf32> to vector<1x16x128xf32>
    tpu.vector_store %arg14[%c0_125, %c0_126, %c0_127], %203 {strides = array<i32>} : memref<1x16x128xf32, #tpu.memory_space<vmem>>, vector<1x16x128xf32>,
    return
  }
  func.func @transform_0(%arg0: i32) -> (i32, i32, i32) {
    %c0_i32 = arith.constant 0 : i32
    %c0_i32_0 = arith.constant 0 : i32
    %c0_i32_1 = arith.constant 0 : i32
    return %arg0, %c0_i32, %c0_i32_0 : i32, i32, i32
  }
  func.func @transform_1(%arg0: i32) -> (i32, i32) {
    %c0_i32 = arith.constant 0 : i32
    %c0_i32_0 = arith.constant 0 : i32
    %c0_i32_1 = arith.constant 0 : i32
    return %c0_i32, %c0_i32_0 : i32, i32
  }
  func.func @transform_2(%arg0: i32) -> (i32, i32) {
    %c0_i32 = arith.constant 0 : i32
    %c0_i32_0 = arith.constant 0 : i32
    %c0_i32_1 = arith.constant 0 : i32
    return %c0_i32, %c0_i32_0 : i32, i32
  }
  func.func @transform_3(%arg0: i32) -> (i32, i32) {
    %c0_i32 = arith.constant 0 : i32
    %c0_i32_0 = arith.constant 0 : i32
    %c0_i32_1 = arith.constant 0 : i32
    return %c0_i32, %c0_i32_0 : i32, i32
  }
  func.func @transform_4(%arg0: i32) -> (i32, i32) {
    %c0_i32 = arith.constant 0 : i32
    %c0_i32_0 = arith.constant 0 : i32
    %c0_i32_1 = arith.constant 0 : i32
    return %c0_i32, %c0_i32_0 : i32, i32
  }
  func.func @transform_5(%arg0: i32) -> (i32, i32) {
    %c0_i32 = arith.constant 0 : i32
    %c0_i32_0 = arith.constant 0 : i32
    %c0_i32_1 = arith.constant 0 : i32
    return %c0_i32, %c0_i32_0 : i32, i32
  }
  func.func @transform_6(%arg0: i32) -> (i32, i32) {
    %c0_i32 = arith.constant 0 : i32
    %c0_i32_0 = arith.constant 0 : i32
    %c0_i32_1 = arith.constant 0 : i32
    return %c0_i32, %c0_i32_0 : i32, i32
  }
  func.func @transform_7(%arg0: i32) -> (i32, i32) {
    %c0_i32 = arith.constant 0 : i32
    %c0_i32_0 = arith.constant 0 : i32
    %c0_i32_1 = arith.constant 0 : i32
    return %c0_i32, %c0_i32_0 : i32, i32
  }
  func.func @transform_8(%arg0: i32) -> (i32, i32) {
    %c0_i32 = arith.constant 0 : i32
    %c0_i32_0 = arith.constant 0 : i32
    %c0_i32_1 = arith.constant 0 : i32
    return %c0_i32, %c0_i32_0 : i32, i32
  }
  func.func @transform_9(%arg0: i32) -> (i32, i32) {
    %c0_i32 = arith.constant 0 : i32
    %c0_i32_0 = arith.constant 0 : i32
    %c0_i32_1 = arith.constant 0 : i32
    return %c0_i32, %c0_i32_0 : i32, i32
  }
  func.func @transform_10(%arg0: i32) -> (i32, i32) {
    %c0_i32 = arith.constant 0 : i32
    %c0_i32_0 = arith.constant 0 : i32
    %c0_i32_1 = arith.constant 0 : i32
    return %c0_i32, %c0_i32_0 : i32, i32
  }
  func.func @transform_11(%arg0: i32) -> (i32, i32) {
    %c0_i32 = arith.constant 0 : i32
    %c0_i32_0 = arith.constant 0 : i32
    %c0_i32_1 = arith.constant 0 : i32
    return %c0_i32, %c0_i32_0 : i32, i32
  }
  func.func @transform_12(%arg0: i32) -> (i32, i32) {
    %c0_i32 = arith.constant 0 : i32
    %c0_i32_0 = arith.constant 0 : i32
    %c0_i32_1 = arith.constant 0 : i32
    return %c0_i32, %c0_i32_0 : i32, i32
  }
  func.func @transform_13(%arg0: i32) -> (i32, i32, i32) {
    %c0_i32 = arith.constant 0 : i32
    %c0_i32_0 = arith.constant 0 : i32
    %c0_i32_1 = arith.constant 0 : i32
    return %arg0, %c0_i32, %c0_i32_0 : i32, i32, i32
  }
}

</mosaic_0001>

<llo_original>
// kernel: tpu_custom_call.1
$region0: #{tpu_custom_call.1}
  #allocation0 [shape = 'u32[]', space=smem, size = 0x4, offset = 0x4, fixed_abs, tag = 'smem constant byte address 0x4 - core index']
  #allocation1 [shape = 'u32[72,128]{1,0:T(1,128)}', space=vmem, size = 0x9000, scoped, tag = 'internal scratch']
  #allocation2 [shape = 'f32[16,128]{1,0:T(8,128)}', space=vmem, size = 0x2000, scoped, tag = 'scratch operand']
  %s0 = inlined_call_operand.hbm [shape: f32[2,32,128], index: 0, kind: input, shape index: {}]
  %s1 = inlined_call_operand.vmem [shape: f32[24,2], index: 1, kind: input, shape index: {}]
  %s2 = inlined_call_operand.vmem [shape: f32[9,128], index: 2, kind: input, shape index: {}]
  %s3 = inlined_call_operand.vmem [shape: f32[1,128], index: 3, kind: input, shape index: {}]
  %s4 = inlined_call_operand.hbm [shape: f32[128,128], index: 4, kind: input, shape index: {}]
  %s5 = inlined_call_operand.vmem [shape: f32[1,128], index: 5, kind: input, shape index: {}]
  %s6 = inlined_call_operand.hbm [shape: f32[128,128], index: 6, kind: input, shape index: {}]
  %s7 = inlined_call_operand.hbm [shape: f32[128,128], index: 7, kind: input, shape index: {}]
  %s8 = inlined_call_operand.vmem [shape: f32[1,128], index: 8, kind: input, shape index: {}]
  %s9 = inlined_call_operand.hbm [shape: f32[128,128], index: 9, kind: input, shape index: {}]
  %s10 = inlined_call_operand.vmem [shape: f32[1,128], index: 10, kind: input, shape index: {}]
  %s11 = inlined_call_operand.vmem [shape: f32[2,3], index: 11, kind: input, shape index: {}]
  %s12 = inlined_call_operand.vmem [shape: f32[16,1], index: 12, kind: input, shape index: {}]
  %s13 = inlined_call_operand.hbm [shape: f32[2,16,128], index: 13, kind: output, shape index: {}]
  %s14 = sld [smem:[#allocation0]]
  $region105: #{tpu_custom_call.1} parent=0
    _
  %s16 = ssub.s32 1, %s14
  %s17 = scalar_select 0, %s16, %s14
  $region1: #{tpu_custom_call.1} parent=0
    #allocation3 [shape = 'u8[32768]{0}', space=vmem, size = 0x8000, scoped, tag = 'input window, operand 0']
    #allocation4 [shape = 's32[2]{0}', space=sflag, size = 0x8, scoped, tag = 'scoped memory for tpu_custom_call.1']
    #allocation5 [shape = 's32[2]{0}', space=sflag, size = 0x8, scoped, tag = 'scoped memory for tpu_custom_call.1']
    #allocation6 [shape = 'u8[65536]{0}', space=vmem, size = 0x10000, scoped, tag = 'input window, operand 4, single buffered']
    #allocation7 [shape = 's32[1]{0}', space=sflag, size = 0x4, scoped, tag = 'scoped memory for tpu_custom_call.1']
    #allocation8 [shape = 'u8[65536]{0}', space=vmem, size = 0x10000, scoped, tag = 'input window, operand 6, single buffered']
    #allocation9 [shape = 'u8[65536]{0}', space=vmem, size = 0x10000, scoped, tag = 'input window, operand 7, single buffered']
    #allocation10 [shape = 's32[1]{0}', space=sflag, size = 0x4, scoped, tag = 'scoped memory for tpu_custom_call.1']
    #allocation11 [shape = 'u8[65536]{0}', space=vmem, size = 0x10000, scoped, tag = 'input window, operand 9, single buffered']
    #allocation12 [shape = 'u8[16384]{0}', space=vmem, size = 0x4000, scoped, tag = 'output window, operand 0']
    %18 = vsyncpa [#allocation4], 0
    %s19 = scalar_lea.sflag [#allocation4], 1
    %20 = vsyncpa %s19, 0
    %21 = vsyncpa [#allocation7], 0
    %22 = vsyncpa [#allocation10], 0
    %23 = vsyncpa [#allocation5], 0
    %s24 = scalar_lea.sflag [#allocation5], 1
    %25 = vsyncpa %s24, 0
    loop: start=0, step=1, limit=4
    $region2: #{tpu_custom_call.1} parent=1 // loop_pre_header
      _
    $region3: #{tpu_custom_call.1} parent=1 // loop_header
      %s27 = sphi 0, %s31
      %p28 = scmp.ge.s32.totalorder %s27, 4
      %s37 = sphi 0, %s39
      %s40 = sphi 0, %s37
      %s41 = sphi 0, %s40
      %s57 = sphi 0, %s41
      %s61 = sphi 0, %s61
      %s63 = sphi 0, %s61
      %s64 = sphi 0, %s63
      %s78 = sphi 0, %s64
      %s82 = sphi 0, %s82
      %s84 = sphi 0, %s82
      %s85 = sphi 0, %s84
      %s99 = sphi 0, %s85
      %s103 = sphi 0, %s103
      %s105 = sphi 0, %s103
      %s106 = sphi 0, %s105
      %s120 = sphi 0, %s106
      %s124 = sphi 0, %s124
      %s126 = sphi 0, %s124
      %s127 = sphi 0, %s126
      %s141 = sphi 0, %s127
      %s145 = sphi 0, %s145
      %s147 = sphi 0, %s145
      %s148 = sphi 0, %s147
      %s162 = sphi 0, %s148
      %s166 = sphi 0, %s166
      %s168 = sphi 0, %s166
      %s169 = sphi 0, %s168
      %s183 = sphi 0, %s169
      %s187 = sphi 0, %s187
      %s189 = sphi 0, %s187
      %s190 = sphi 0, %s189
      %s204 = sphi 0, %s190
      %s208 = sphi 0, %s208
      %s210 = sphi 0, %s208
      %s211 = sphi 0, %s210
      %s225 = sphi 0, %s211
      %s229 = sphi 0, %s229
      %s231 = sphi 0, %s229
      %s232 = sphi 0, %s231
      %s246 = sphi 0, %s232
      %s250 = sphi 0, %s250
      %s252 = sphi 0, %s250
      %s253 = sphi 0, %s252
      %s267 = sphi 0, %s253
      %s271 = sphi 0, %s271
      %s273 = sphi 0, %s271
      %s274 = sphi 0, %s273
      %s288 = sphi 0, %s274
      %s292 = sphi 0, %s292
      %s294 = sphi 0, %s292
      %s295 = sphi 0, %s294
      %s309 = sphi 0, %s295
      %s315 = sphi 0, %s317
      %s318 = sphi 0, %s315
      %s319 = sphi 0, %s318
      %s335 = sphi 0, %s319
    $region4: #{tpu_custom_call.1} parent=1 // loop_header_branch
      %30 = sbr.rel (%p28) target = $region8
    $region5: #{tpu_custom_call.1} parent=1 // loop_body
      %s32 = ssub.s32 %s27, 1
      %s33 = ssub.s32 %s27, 2
      %s34 = sadd.s32 %s27, 1
      %s35 = ssub.s32 %s27, %s34
      %p36 = scmp.eq.s32.totalorder %s35, 0
      %s38 = sadd.s32 %s37, 1
      %s39 = scalar_select %p36, %s37, %s38
      %p42 = pneg %p36
      %p43 = scmp.eq.s32.totalorder %s27, 1
      %p44 = por %p42, %p43
      %p45 = scmp.ne.s32.totalorder %s37, %s40
      %p46 = scmp.eq.s32.totalorder %s27, 0
      %p47 = por %p45, %p46
      %p48 = scmp.ne.s32.totalorder %s37, %s40
      %p49 = scmp.eq.s32.totalorder %s32, 1
      %p50 = por %p48, %p49
      %p51 = scmp.ne.s32.totalorder %s40, %s41
      %p52 = scmp.eq.s32.totalorder %s32, 0
      %p53 = por %p51, %p52
      %p54 = scmp.ne.s32.totalorder %s40, %s41
      %p55 = scmp.eq.s32.totalorder %s33, 1
      %p56 = por %p54, %p55
      %p58 = scmp.ne.s32.totalorder %s41, %s57
      %p59 = scmp.eq.s32.totalorder %s33, 0
      %p60 = por %p58, %p59
      %s62 = sadd.s32 %s61, 1
      %p65 = scmp.eq.s32.totalorder %s27, 1
      %p66 = scmp.ne.s32.totalorder %s61, %s63
      %p67 = scmp.eq.s32.totalorder %s27, 0
      %p68 = por %p66, %p67
      %p69 = scmp.ne.s32.totalorder %s61, %s63
      %p70 = scmp.eq.s32.totalorder %s32, 1
      %p71 = por %p69, %p70
      %p72 = scmp.ne.s32.totalorder %s63, %s64
      %p73 = scmp.eq.s32.totalorder %s32, 0
      %p74 = por %p72, %p73
      %p75 = scmp.ne.s32.totalorder %s63, %s64
      %p76 = scmp.eq.s32.totalorder %s33, 1
      %p77 = por %p75, %p76
      %p79 = scmp.ne.s32.totalorder %s64, %s78
      %p80 = scmp.eq.s32.totalorder %s33, 0
      %p81 = por %p79, %p80
      %s83 = sadd.s32 %s82, 1
      %p86 = scmp.eq.s32.totalorder %s27, 1
      %p87 = scmp.ne.s32.totalorder %s82, %s84
      %p88 = scmp.eq.s32.totalorder %s27, 0
      %p89 = por %p87, %p88
      %p90 = scmp.ne.s32.totalorder %s82, %s84
      %p91 = scmp.eq.s32.totalorder %s32, 1
      %p92 = por %p90, %p91
      %p93 = scmp.ne.s32.totalorder %s84, %s85
      %p94 = scmp.eq.s32.totalorder %s32, 0
      %p95 = por %p93, %p94
      %p96 = scmp.ne.s32.totalorder %s84, %s85
      %p97 = scmp.eq.s32.totalorder %s33, 1
      %p98 = por %p96, %p97
      %p100 = scmp.ne.s32.totalorder %s85, %s99
      %p101 = scmp.eq.s32.totalorder %s33, 0
      %p102 = por %p100, %p101
      %s104 = sadd.s32 %s103, 1
      %p107 = scmp.eq.s32.totalorder %s27, 1
      %p108 = scmp.ne.s32.totalorder %s103, %s105
      %p109 = scmp.eq.s32.totalorder %s27, 0
      %p110 = por %p108, %p109
      %p111 = scmp.ne.s32.totalorder %s103, %s105
      %p112 = scmp.eq.s32.totalorder %s32, 1
      %p113 = por %p111, %p112
      %p114 = scmp.ne.s32.totalorder %s105, %s106
      %p115 = scmp.eq.s32.totalorder %s32, 0
      %p116 = por %p114, %p115
      %p117 = scmp.ne.s32.totalorder %s105, %s106
      %p118 = scmp.eq.s32.totalorder %s33, 1
      %p119 = por %p117, %p118
      %p121 = scmp.ne.s32.totalorder %s106, %s120
      %p122 = scmp.eq.s32.totalorder %s33, 0
      %p123 = por %p121, %p122
      %s125 = sadd.s32 %s124, 1
      %p128 = scmp.eq.s32.totalorder %s27, 1
      %p129 = scmp.ne.s32.totalorder %s124, %s126
      %p130 = scmp.eq.s32.totalorder %s27, 0
      %p131 = por %p129, %p130
      %p132 = scmp.ne.s32.totalorder %s124, %s126
      %p133 = scmp.eq.s32.totalorder %s32, 1
      %p134 = por %p132, %p133
      %p135 = scmp.ne.s32.totalorder %s126, %s127
      %p136 = scmp.eq.s32.totalorder %s32, 0
      %p137 = por %p135, %p136
      %p138 = scmp.ne.s32.totalorder %s126, %s127
      %p139 = scmp.eq.s32.totalorder %s33, 1
      %p140 = por %p138, %p139
      %p142 = scmp.ne.s32.totalorder %s127, %s141
      %p143 = scmp.eq.s32.totalorder %s33, 0
      %p144 = por %p142, %p143
      %s146 = sadd.s32 %s145, 1
      %p149 = scmp.eq.s32.totalorder %s27, 1
      %p150 = scmp.ne.s32.totalorder %s145, %s147
      %p151 = scmp.eq.s32.totalorder %s27, 0
      %p152 = por %p150, %p151
      %p153 = scmp.ne.s32.totalorder %s145, %s147
      %p154 = scmp.eq.s32.totalorder %s32, 1
      %p155 = por %p153, %p154
      %p156 = scmp.ne.s32.totalorder %s147, %s148
      %p157 = scmp.eq.s32.totalorder %s32, 0
      %p158 = por %p156, %p157
      %p159 = scmp.ne.s32.totalorder %s147, %s148
      %p160 = scmp.eq.s32.totalorder %s33, 1
      %p161 = por %p159, %p160
      %p163 = scmp.ne.s32.totalorder %s148, %s162
      %p164 = scmp.eq.s32.totalorder %s33, 0
      %p165 = por %p163, %p164
      %s167 = sadd.s32 %s166, 1
      %p170 = scmp.eq.s32.totalorder %s27, 1
      %p171 = scmp.ne.s32.totalorder %s166, %s168
      %p172 = scmp.eq.s32.totalorder %s27, 0
      %p173 = por %p171, %p172
      %p174 = scmp.ne.s32.totalorder %s166, %s168
      %p175 = scmp.eq.s32.totalorder %s32, 1
      %p176 = por %p174, %p175
      %p177 = scmp.ne.s32.totalorder %s168, %s169
      %p178 = scmp.eq.s32.totalorder %s32, 0
      %p179 = por %p177, %p178
      %p180 = scmp.ne.s32.totalorder %s168, %s169
      %p181 = scmp.eq.s32.totalorder %s33, 1
      %p182 = por %p180, %p181
      %p184 = scmp.ne.s32.totalorder %s169, %s183
      %p185 = scmp.eq.s32.totalorder %s33, 0
      %p186 = por %p184, %p185
      %s188 = sadd.s32 %s187, 1
      %p191 = scmp.eq.s32.totalorder %s27, 1
      %p192 = scmp.ne.s32.totalorder %s187, %s189
      %p193 = scmp.eq.s32.totalorder %s27, 0
      %p194 = por %p192, %p193
      %p195 = scmp.ne.s32.totalorder %s187, %s189
      %p196 = scmp.eq.s32.totalorder %s32, 1
      %p197 = por %p195, %p196
      %p198 = scmp.ne.s32.totalorder %s189, %s190
      %p199 = scmp.eq.s32.totalorder %s32, 0
      %p200 = por %p198, %p199
      %p201 = scmp.ne.s32.totalorder %s189, %s190
      %p202 = scmp.eq.s32.totalorder %s33, 1
      %p203 = por %p201, %p202
      %p205 = scmp.ne.s32.totalorder %s190, %s204
      %p206 = scmp.eq.s32.totalorder %s33, 0
      %p207 = por %p205, %p206
      %s209 = sadd.s32 %s208, 1
      %p212 = scmp.eq.s32.totalorder %s27, 1
      %p213 = scmp.ne.s32.totalorder %s208, %s210
      %p214 = scmp.eq.s32.totalorder %s27, 0
      %p215 = por %p213, %p214
      %p216 = scmp.ne.s32.totalorder %s208, %s210
      %p217 = scmp.eq.s32.totalorder %s32, 1
      %p218 = por %p216, %p217
      %p219 = scmp.ne.s32.totalorder %s210, %s211
      %p220 = scmp.eq.s32.totalorder %s32, 0
      %p221 = por %p219, %p220
      %p222 = scmp.ne.s32.totalorder %s210, %s211
      %p223 = scmp.eq.s32.totalorder %s33, 1
      %p224 = por %p222, %p223
      %p226 = scmp.ne.s32.totalorder %s211, %s225
      %p227 = scmp.eq.s32.totalorder %s33, 0
      %p228 = por %p226, %p227
      %s230 = sadd.s32 %s229, 1
      %p233 = scmp.eq.s32.totalorder %s27, 1
      %p234 = scmp.ne.s32.totalorder %s229, %s231
      %p235 = scmp.eq.s32.totalorder %s27, 0
      %p236 = por %p234, %p235
      %p237 = scmp.ne.s32.totalorder %s229, %s231
      %p238 = scmp.eq.s32.totalorder %s32, 1
      %p239 = por %p237, %p238
      %p240 = scmp.ne.s32.totalorder %s231, %s232
      %p241 = scmp.eq.s32.totalorder %s32, 0
      %p242 = por %p240, %p241
      %p243 = scmp.ne.s32.totalorder %s231, %s232
      %p244 = scmp.eq.s32.totalorder %s33, 1
      %p245 = por %p243, %p244
      %p247 = scmp.ne.s32.totalorder %s232, %s246
      %p248 = scmp.eq.s32.totalorder %s33, 0
      %p249 = por %p247, %p248
      %s251 = sadd.s32 %s250, 1
      %p254 = scmp.eq.s32.totalorder %s27, 1
      %p255 = scmp.ne.s32.totalorder %s250, %s252
      %p256 = scmp.eq.s32.totalorder %s27, 0
      %p257 = por %p255, %p256
      %p258 = scmp.ne.s32.totalorder %s250, %s252
      %p259 = scmp.eq.s32.totalorder %s32, 1
      %p260 = por %p258, %p259
      %p261 = scmp.ne.s32.totalorder %s252, %s253
      %p262 = scmp.eq.s32.totalorder %s32, 0
      %p263 = por %p261, %p262
      %p264 = scmp.ne.s32.totalorder %s252, %s253
      %p265 = scmp.eq.s32.totalorder %s33, 1
      %p266 = por %p264, %p265
      %p268 = scmp.ne.s32.totalorder %s253, %s267
      %p269 = scmp.eq.s32.totalorder %s33, 0
      %p270 = por %p268, %p269
      %s272 = sadd.s32 %s271, 1
      %p275 = scmp.eq.s32.totalorder %s27, 1
      %p276 = scmp.ne.s32.totalorder %s271, %s273
      %p277 = scmp.eq.s32.totalorder %s27, 0
      %p278 = por %p276, %p277
      %p279 = scmp.ne.s32.totalorder %s271, %s273
      %p280 = scmp.eq.s32.totalorder %s32, 1
      %p281 = por %p279, %p280
      %p282 = scmp.ne.s32.totalorder %s273, %s274
      %p283 = scmp.eq.s32.totalorder %s32, 0
      %p284 = por %p282, %p283
      %p285 = scmp.ne.s32.totalorder %s273, %s274
      %p286 = scmp.eq.s32.totalorder %s33, 1
      %p287 = por %p285, %p286
      %p289 = scmp.ne.s32.totalorder %s274, %s288
      %p290 = scmp.eq.s32.totalorder %s33, 0
      %p291 = por %p289, %p290
      %s293 = sadd.s32 %s292, 1
      %p296 = scmp.eq.s32.totalorder %s27, 1
      %p297 = scmp.ne.s32.totalorder %s292, %s294
      %p298 = scmp.eq.s32.totalorder %s27, 0
      %p299 = por %p297, %p298
      %p300 = scmp.ne.s32.totalorder %s292, %s294
      %p301 = scmp.eq.s32.totalorder %s32, 1
      %p302 = por %p300, %p301
      %p303 = scmp.ne.s32.totalorder %s294, %s295
      %p304 = scmp.eq.s32.totalorder %s32, 0
      %p305 = por %p303, %p304
      %p306 = scmp.ne.s32.totalorder %s294, %s295
      %p307 = scmp.eq.s32.totalorder %s33, 1
      %p308 = por %p306, %p307
      %p310 = scmp.ne.s32.totalorder %s295, %s309
      %p311 = scmp.eq.s32.totalorder %s33, 0
      %p312 = por %p310, %p311
      %s313 = ssub.s32 %s27, %s34
      %p314 = scmp.eq.s32.totalorder %s313, 0
      %s316 = sadd.s32 %s315, 1
      %s317 = scalar_select %p314, %s315, %s316
      %p320 = pneg %p314
      %p321 = scmp.eq.s32.totalorder %s27, 1
      %p322 = por %p320, %p321
      %p323 = scmp.ne.s32.totalorder %s315, %s318
      %p324 = scmp.eq.s32.totalorder %s27, 0
      %p325 = por %p323, %p324
      %p326 = scmp.ne.s32.totalorder %s315, %s318
      %p327 = scmp.eq.s32.totalorder %s32, 1
      %p328 = por %p326, %p327
      %p329 = scmp.ne.s32.totalorder %s318, %s319
      %p330 = scmp.eq.s32.totalorder %s32, 0
      %p331 = por %p329, %p330
      %p332 = scmp.ne.s32.totalorder %s318, %s319
      %p333 = scmp.eq.s32.totalorder %s33, 1
      %p334 = por %p332, %p333
      %p336 = scmp.ne.s32.totalorder %s319, %s335
      %p337 = scmp.eq.s32.totalorder %s33, 0
      %p338 = por %p336, %p337
      %p339 = scmp.le.s32.totalorder 1, %s27
      %p340 = scmp.lt.s32.totalorder %s27, 3
      %p341 = pnand %p339, %p340
      %p342 = pneg %p341
      // Predicated region
      $region9: #{tpu_custom_call.1} parent=5 // pred_check
        _
      $region10: #{tpu_custom_call.1} parent=5 // pred_check_branch
        %344 = sbr.rel (%p341) target = $region12
      $region11: #{tpu_custom_call.1} parent=5 // pred_region
        %s345 = ssub.s32 %s27, 1
        // Predicated region
        $region13: #{tpu_custom_call.1} parent=11 // pred_check
          %p346 = pneg %p74
        $region14: #{tpu_custom_call.1} parent=11 // pred_check_branch
          %348 = sbr.rel (%p346) target = $region16
        $region15: #{tpu_custom_call.1} parent=11 // pred_region
          _
        $region16: #{tpu_custom_call.1} parent=11 // pred_fallthru
          _
        // Predicated region
        $region17: #{tpu_custom_call.1} parent=11 // pred_check
          %p349 = pneg %p95
        $region18: #{tpu_custom_call.1} parent=11 // pred_check_branch
          %351 = sbr.rel (%p349) target = $region20
        $region19: #{tpu_custom_call.1} parent=11 // pred_region
          _
        $region20: #{tpu_custom_call.1} parent=11 // pred_fallthru
          _
        // Predicated region
        $region21: #{tpu_custom_call.1} parent=11 // pred_check
          %p352 = pneg %p116
        $region22: #{tpu_custom_call.1} parent=11 // pred_check_branch
          %354 = sbr.rel (%p352) target = $region24
        $region23: #{tpu_custom_call.1} parent=11 // pred_region
          _
        $region24: #{tpu_custom_call.1} parent=11 // pred_fallthru
          _
        // Predicated region
        $region25: #{tpu_custom_call.1} parent=11 // pred_check
          %p355 = pneg %p137
        $region26: #{tpu_custom_call.1} parent=11 // pred_check_branch
          %357 = sbr.rel (%p355) target = $region28
        $region27: #{tpu_custom_call.1} parent=11 // pred_region
          %359 = vsyncadd [#allocation7], 0
          %s360 = sshll.u32 %s4, 4
          %s361 = int_to_ptr.hbm [resolvable:$true] %s360
          %s362 = sshll.u32 [#allocation6], 4
          %s363 = int_to_ptr.vmem [resolvable:$true] %s362
          %368 = dma.hbm_to_vmem [thread:$0]  %s361, 2048, %s363, [#allocation7], 128, 128, 8
        $region28: #{tpu_custom_call.1} parent=11 // pred_fallthru
          _
        // Predicated region
        $region29: #{tpu_custom_call.1} parent=11 // pred_check
          %p369 = pneg %p158
        $region30: #{tpu_custom_call.1} parent=11 // pred_check_branch
          %371 = sbr.rel (%p369) target = $region32
        $region31: #{tpu_custom_call.1} parent=11 // pred_region
          _
        $region32: #{tpu_custom_call.1} parent=11 // pred_fallthru
          _
        // Predicated region
        $region33: #{tpu_custom_call.1} parent=11 // pred_check
          %p372 = pneg %p179
        $region34: #{tpu_custom_call.1} parent=11 // pred_check_branch
          %374 = sbr.rel (%p372) target = $region36
        $region35: #{tpu_custom_call.1} parent=11 // pred_region
          %376 = vsyncadd [#allocation7], 0
          %s377 = sshll.u32 %s6, 4
          %s378 = int_to_ptr.hbm [resolvable:$true] %s377
          %s379 = sshll.u32 [#allocation8], 4
          %s380 = int_to_ptr.vmem [resolvable:$true] %s379
          %385 = dma.hbm_to_vmem [thread:$0]  %s378, 2048, %s380, [#allocation7], 128, 128, 8
        $region36: #{tpu_custom_call.1} parent=11 // pred_fallthru
          _
        // Predicated region
        $region37: #{tpu_custom_call.1} parent=11 // pred_check
          %p386 = pneg %p200
        $region38: #{tpu_custom_call.1} parent=11 // pred_check_branch
          %388 = sbr.rel (%p386) target = $region40
        $region39: #{tpu_custom_call.1} parent=11 // pred_region
          %390 = vsyncadd [#allocation10], 0
          %s391 = sshll.u32 %s7, 4
          %s392 = int_to_ptr.hbm [resolvable:$true] %s391
          %s393 = sshll.u32 [#allocation9], 4
          %s394 = int_to_ptr.vmem [resolvable:$true] %s393
          %399 = dma.hbm_to_vmem [thread:$0]  %s392, 2048, %s394, [#allocation10], 128, 128, 8
        $region40: #{tpu_custom_call.1} parent=11 // pred_fallthru
          _
        // Predicated region
        $region41: #{tpu_custom_call.1} parent=11 // pred_check
          %p400 = pneg %p221
        $region42: #{tpu_custom_call.1} parent=11 // pred_check_branch
          %402 = sbr.rel (%p400) target = $region44
        $region43: #{tpu_custom_call.1} parent=11 // pred_region
          _
        $region44: #{tpu_custom_call.1} parent=11 // pred_fallthru
          _
        // Predicated region
        $region45: #{tpu_custom_call.1} parent=11 // pred_check
          %p403 = pneg %p242
        $region46: #{tpu_custom_call.1} parent=11 // pred_check_branch
          %405 = sbr.rel (%p403) target = $region48
        $region47: #{tpu_custom_call.1} parent=11 // pred_region
          %407 = vsyncadd [#allocation10], 0
          %s408 = sshll.u32 %s9, 4
          %s409 = int_to_ptr.hbm [resolvable:$true] %s408
          %s410 = sshll.u32 [#allocation11], 4
          %s411 = int_to_ptr.vmem [resolvable:$true] %s410
          %416 = dma.hbm_to_vmem [thread:$0]  %s409, 2048, %s411, [#allocation10], 128, 128, 8
        $region48: #{tpu_custom_call.1} parent=11 // pred_fallthru
          _
        // Predicated region
        $region49: #{tpu_custom_call.1} parent=11 // pred_check
          %p417 = pneg %p263
        $region50: #{tpu_custom_call.1} parent=11 // pred_check_branch
          %419 = sbr.rel (%p417) target = $region52
        $region51: #{tpu_custom_call.1} parent=11 // pred_region
          _
        $region52: #{tpu_custom_call.1} parent=11 // pred_fallthru
          _
        // Predicated region
        $region53: #{tpu_custom_call.1} parent=11 // pred_check
          %p420 = pneg %p284
        $region54: #{tpu_custom_call.1} parent=11 // pred_check_branch
          %422 = sbr.rel (%p420) target = $region56
        $region55: #{tpu_custom_call.1} parent=11 // pred_region
          _
        $region56: #{tpu_custom_call.1} parent=11 // pred_fallthru
          _
        // Predicated region
        $region57: #{tpu_custom_call.1} parent=11 // pred_check
          %p423 = pneg %p305
        $region58: #{tpu_custom_call.1} parent=11 // pred_check_branch
          %425 = sbr.rel (%p423) target = $region60
        $region59: #{tpu_custom_call.1} parent=11 // pred_region
          _
        $region60: #{tpu_custom_call.1} parent=11 // pred_fallthru
          _
      $region12: #{tpu_custom_call.1} parent=5 // pred_fallthru
        _
      %p426 = scmp.lt.s32.totalorder %s27, 2
      // Predicated region
      $region61: #{tpu_custom_call.1} parent=5 // pred_check
        %p427 = pneg %p426
      $region62: #{tpu_custom_call.1} parent=5 // pred_check_branch
        %429 = sbr.rel (%p427) target = $region64
      $region63: #{tpu_custom_call.1} parent=5 // pred_region
        // Predicated region
        $region65: #{tpu_custom_call.1} parent=63 // pred_check
          %p430 = pneg %p47
        $region66: #{tpu_custom_call.1} parent=63 // pred_check_branch
          %432 = sbr.rel (%p430) target = $region68
        $region67: #{tpu_custom_call.1} parent=63 // pred_region
          %s433 = sand.u32 %s37, 1
          %s434 = scalar_lea.sflag [#allocation4], %s433
          %s435 = sand.u32 %s37, 1
          %s436 = smul.addr %s435, 32
          %s437 = scalar_lea.vmem [#allocation3], %s436
          %439 = vsyncadd %s434, 0
          %s440 = smul.addr %s27, 4
          %s441 = smul.addr %s440, 8
          %s442 = scalar_lea.hbm %s0, %s441
          %s443 = sshll.u32 %s442, 4
          %s444 = int_to_ptr.hbm [resolvable:$true] %s443
          %s445 = sshll.u32 %s437, 4
          %s446 = int_to_ptr.vmem [resolvable:$true] %s445
          %451 = dma.hbm_to_vmem [thread:$0]  %s444, 512, %s446, %s434, 128, 128, 8
        $region68: #{tpu_custom_call.1} parent=63 // pred_fallthru
          _
      $region64: #{tpu_custom_call.1} parent=5 // pred_fallthru
        _
      %p452 = scmp.le.s32.totalorder 1, %s27
      %p453 = scmp.lt.s32.totalorder %s27, 3
      %p454 = pnand %p452, %p453
      %p455 = pneg %p454
      // Predicated region
      $region69: #{tpu_custom_call.1} parent=5 // pred_check
        _
      $region70: #{tpu_custom_call.1} parent=5 // pred_check_branch
        %457 = sbr.rel (%p454) target = $region72
      $region71: #{tpu_custom_call.1} parent=5 // pred_region
        %s458 = ssub.s32 %s27, 1
        %s459 = sand.u32 %s40, 1
        %s460 = scalar_lea.sflag [#allocation4], %s459
        %s461 = sand.u32 %s40, 1
        %s462 = smul.addr %s461, 32
        %s463 = scalar_lea.vmem [#allocation3], %s462
        // Predicated region
        $region73: #{tpu_custom_call.1} parent=71 // pred_check
          %p464 = pneg %p53
        $region74: #{tpu_custom_call.1} parent=71 // pred_check_branch
          %466 = sbr.rel (%p464) target = $region76
        $region75: #{tpu_custom_call.1} parent=71 // pred_region
          %468 = dma.done %s460, 512
        $region76: #{tpu_custom_call.1} parent=71 // pred_fallthru
          _
        // Predicated region
        $region77: #{tpu_custom_call.1} parent=71 // pred_check
          %p469 = pneg %p137
        $region78: #{tpu_custom_call.1} parent=71 // pred_check_branch
          %471 = sbr.rel (%p469) target = $region80
        $region79: #{tpu_custom_call.1} parent=71 // pred_region
          %473 = dma.done [#allocation7], 2048
        $region80: #{tpu_custom_call.1} parent=71 // pred_fallthru
          _
        // Predicated region
        $region81: #{tpu_custom_call.1} parent=71 // pred_check
          %p474 = pneg %p179
        $region82: #{tpu_custom_call.1} parent=71 // pred_check_branch
          %476 = sbr.rel (%p474) target = $region84
        $region83: #{tpu_custom_call.1} parent=71 // pred_region
          %478 = dma.done [#allocation7], 2048
        $region84: #{tpu_custom_call.1} parent=71 // pred_fallthru
          _
        // Predicated region
        $region85: #{tpu_custom_call.1} parent=71 // pred_check
          %p479 = pneg %p200
        $region86: #{tpu_custom_call.1} parent=71 // pred_check_branch
          %481 = sbr.rel (%p479) target = $region88
        $region87: #{tpu_custom_call.1} parent=71 // pred_region
          %483 = dma.done [#allocation10], 2048
        $region88: #{tpu_custom_call.1} parent=71 // pred_fallthru
          _
        // Predicated region
        $region89: #{tpu_custom_call.1} parent=71 // pred_check
          %p484 = pneg %p242
        $region90: #{tpu_custom_call.1} parent=71 // pred_check_branch
          %486 = sbr.rel (%p484) target = $region92
        $region91: #{tpu_custom_call.1} parent=71 // pred_region
          %488 = dma.done [#allocation10], 2048
        $region92: #{tpu_custom_call.1} parent=71 // pred_fallthru
          _
        %s489 = sand.u32 %s40, 1
        %s490 = scalar_lea.sflag [#allocation4], %s489
        %s491 = sand.u32 %s40, 1
        %s492 = smul.addr %s491, 32
        %s493 = scalar_lea.vmem [#allocation3], %s492
        %p494 = pneg %p53
        %p495 = pneg %p50
        %p496 = pneg %p74
        %p497 = pneg %p71
        %p498 = pneg %p95
        %p499 = pneg %p92
        %p500 = pneg %p116
        %p501 = pneg %p113
        %p502 = pneg %p137
        %p503 = pneg %p134
        %p504 = pneg %p158
        %p505 = pneg %p155
        %p506 = pneg %p179
        %p507 = pneg %p176
        %p508 = pneg %p200
        %p509 = pneg %p197
        %p510 = pneg %p221
        %p511 = pneg %p218
        %p512 = pneg %p242
        %p513 = pneg %p239
        %p514 = pneg %p263
        %p515 = pneg %p260
        %p516 = pneg %p284
        %p517 = pneg %p281
        %p518 = pneg %p305
        %p519 = pneg %p302
        %p520 = pneg %p331
        %p521 = pneg %p328
        %s522 = sand.u32 %s318, 1
        %s523 = scalar_lea.sflag [#allocation5], %s522
        %s524 = sand.u32 %s318, 1
        %s525 = smul.addr %s524, 16
        %s526 = scalar_lea.vmem [#allocation12], %s525
        %v527 = vld [vmem:[%s1] sm:$0xff]
        %v528 = vld [vmem:[%s1 + $0x8] sm:$0xff]
        %v529 = vld [vmem:[%s1 + $0x10] sm:$0xff]
        %v530 = vld [vmem:[%s463 + $0x1] sm:$0xff]
        %v531 = vld [vmem:[%s463 + $0x9] sm:$0xff]
        %v532 = vld [vmem:[%s463 + $0x11] sm:$0xff]
        %v533 = vld [vmem:[%s2 + $0x1] sm:$0x1]
        %v534 = vperm.slane %v533, 0
        %v535 = vmul.f32 %v530, %v534
        %v536 = vmul.f32 %v531, %v534
        %v537 = vmul.f32 %v532, %v534
        %v538 = vld [vmem:[%s463 + $0x4] sm:$0xff]
        %v539 = vld [vmem:[%s463 + $0xc] sm:$0xff]
        %v540 = vld [vmem:[%s463 + $0x14] sm:$0xff]
        %v541 = vld [vmem:[%s2 + $0x4] sm:$0x1]
        %v542 = vperm.slane %v541, 0
        %v543 = vmul.f32 %v538, %v542
        %v544 = vmul.f32 %v539, %v542
        %v545 = vmul.f32 %v540, %v542
        %v546 = vadd.f32 %v535, %v543
        %v547 = vadd.f32 %v536, %v544
        %v548 = vadd.f32 %v537, %v545
        %v549 = vld [vmem:[%s463 + $0x7] sm:$0xff]
        %v550 = vld [vmem:[%s463 + $0xf] sm:$0xff]
        %v551 = vld [vmem:[%s463 + $0x17] sm:$0xff]
        %v552 = vld [vmem:[%s2 + $0x7] sm:$0x1]
        %v553 = vperm.slane %v552, 0
        %v554 = vmul.f32 %v549, %v553
        %v555 = vmul.f32 %v550, %v553
        %v556 = vmul.f32 %v551, %v553
        %v557 = vadd.f32 %v546, %v554
        %v558 = vadd.f32 %v547, %v555
        %v559 = vadd.f32 %v548, %v556
        %v560 = vld [vmem:[%s463] sm:$0xff]
        %v561 = vld [vmem:[%s463 + $0x8] sm:$0xff]
        %v562 = vld [vmem:[%s463 + $0x10] sm:$0xff]
        %v563 = vld [vmem:[%s2] sm:$0x1]
        %v564 = vperm.slane %v563, 0
        %v565 = vmul.f32 %v560, %v564
        %v566 = vmul.f32 %v561, %v564
        %v567 = vmul.f32 %v562, %v564
        %v568 = vld [vmem:[%s463 + $0x3] sm:$0xff]
        %v569 = vld [vmem:[%s463 + $0xb] sm:$0xff]
        %v570 = vld [vmem:[%s463 + $0x13] sm:$0xff]
        %v571 = vld [vmem:[%s2 + $0x3] sm:$0x1]
        %v572 = vperm.slane %v571, 0
        %v573 = vmul.f32 %v568, %v572
        %v574 = vmul.f32 %v569, %v572
        %v575 = vmul.f32 %v570, %v572
        %v576 = vadd.f32 %v565, %v573
        %v577 = vadd.f32 %v566, %v574
        %v578 = vadd.f32 %v567, %v575
        %v579 = vld [vmem:[%s463 + $0x6] sm:$0xff]
        %v580 = vld [vmem:[%s463 + $0xe] sm:$0xff]
        %v581 = vld [vmem:[%s463 + $0x16] sm:$0xff]
        %v582 = vld [vmem:[%s2 + $0x6] sm:$0x1]
        %v583 = vperm.slane %v582, 0
        %v584 = vmul.f32 %v579, %v583
        %v585 = vmul.f32 %v580, %v583
        %v586 = vmul.f32 %v581, %v583
        %v587 = vadd.f32 %v576, %v584
        %v588 = vadd.f32 %v577, %v585
        %v589 = vadd.f32 %v578, %v586
        %591 = vset.pattern.permute.xlu0 0
        %592 = vperm.xlu0 %591, %v527
        %v593 = vpop.permute.xlu0 %592
        %596 = vset.pattern.permute.xlu0 0
        %597 = vperm.xlu0 %596, %v528
        %v598 = vpop.permute.xlu0 %597
        %601 = vset.pattern.permute.xlu0 0
        %602 = vperm.xlu0 %601, %v529
        %v603 = vpop.permute.xlu0 %602
        %v605 = vmul.f32 %v587, %v593
        %v606 = vmul.f32 %v588, %v598
        %v607 = vmul.f32 %v589, %v603
        %v608 = vld [vmem:[%s463 + $0x2] sm:$0xff]
        %v609 = vld [vmem:[%s463 + $0xa] sm:$0xff]
        %v610 = vld [vmem:[%s463 + $0x12] sm:$0xff]
        %v611 = vld [vmem:[%s2 + $0x2] sm:$0x1]
        %v612 = vperm.slane %v611, 0
        %v613 = vmul.f32 %v608, %v612
        %v614 = vmul.f32 %v609, %v612
        %v615 = vmul.f32 %v610, %v612
        %v616 = vld [vmem:[%s463 + $0x5] sm:$0xff]
        %v617 = vld [vmem:[%s463 + $0xd] sm:$0xff]
        %v618 = vld [vmem:[%s463 + $0x15] sm:$0xff]
        %v619 = vld [vmem:[%s2 + $0x5] sm:$0x1]
        %v620 = vperm.slane %v619, 0
        %v621 = vmul.f32 %v616, %v620
        %v622 = vmul.f32 %v617, %v620
        %v623 = vmul.f32 %v618, %v620
        %v624 = vadd.f32 %v613, %v621
        %v625 = vadd.f32 %v614, %v622
        %v626 = vadd.f32 %v615, %v623
        %v627 = vld [vmem:[%s463 + $0x8] sm:$0xff]
        %v628 = vld [vmem:[%s463 + $0x10] sm:$0xff]
        %v629 = vld [vmem:[%s463 + $0x18] sm:$0xff]
        %v630 = vld [vmem:[%s2 + $0x8] sm:$0x1]
        %v631 = vperm.slane %v630, 0
        %v632 = vmul.f32 %v627, %v631
        %v633 = vmul.f32 %v628, %v631
        %v634 = vmul.f32 %v629, %v631
        %v635 = vadd.f32 %v624, %v632
        %v636 = vadd.f32 %v625, %v633
        %v637 = vadd.f32 %v626, %v634
        %638 = vset.pattern.permute.xlu0 1
        %639 = vperm.xlu0 %638, %v527
        %v640 = vpop.permute.xlu0 %639
        %642 = vset.pattern.permute.xlu0 1
        %643 = vperm.xlu0 %642, %v528
        %v644 = vpop.permute.xlu0 %643
        %646 = vset.pattern.permute.xlu0 1
        %647 = vperm.xlu0 %646, %v529
        %v648 = vpop.permute.xlu0 %647
        %v650 = vmul.f32 %v635, %v640
        %v651 = vmul.f32 %v636, %v644
        %v652 = vmul.f32 %v637, %v648
        %v653 = vld [vmem:[%s3] sm:$0x1]
        %v655 = vperm.slane %v653, 0
        %v657 = vadd.f32 %v538, %v655
        %v658 = vadd.f32 %v539, %v655
        %v659 = vadd.f32 %v540, %v655
        %v660 = vadd.f32 %v657, %v557
        %v661 = vadd.f32 %v658, %v558
        %v662 = vadd.f32 %v659, %v559
        %v663 = vadd.f32 %v660, %v605
        %v664 = vadd.f32 %v661, %v606
        %v665 = vadd.f32 %v662, %v607
        %v666 = vadd.f32 %v663, %v650
        %v667 = vadd.f32 %v664, %v651
        %v668 = vadd.f32 %v665, %v652
        %v669 = vld [vmem:[#allocation6] sm:$0xff]
        %v670 = vld [vmem:[#allocation6 + $0x8] sm:$0xff]
        %v671 = vld [vmem:[#allocation6 + $0x10] sm:$0xff]
        %v672 = vld [vmem:[#allocation6 + $0x18] sm:$0xff]
        %v673 = vld [vmem:[#allocation6 + $0x20] sm:$0xff]
        %v674 = vld [vmem:[#allocation6 + $0x28] sm:$0xff]
        %v675 = vld [vmem:[#allocation6 + $0x30] sm:$0xff]
        %v676 = vld [vmem:[#allocation6 + $0x38] sm:$0xff]
        %v677 = vld [vmem:[#allocation6 + $0x40] sm:$0xff]
        %v678 = vld [vmem:[#allocation6 + $0x48] sm:$0xff]
        %v679 = vld [vmem:[#allocation6 + $0x50] sm:$0xff]
        %v680 = vld [vmem:[#allocation6 + $0x58] sm:$0xff]
        %v681 = vld [vmem:[#allocation6 + $0x60] sm:$0xff]
        %v682 = vld [vmem:[#allocation6 + $0x68] sm:$0xff]
        %v683 = vld [vmem:[#allocation6 + $0x70] sm:$0xff]
        %v684 = vld [vmem:[#allocation6 + $0x78] sm:$0xff]
        %v685 = vld [vmem:[%s5] sm:$0x1]
        %v687 = vperm.slane %v685, 0
        %689 = vmatpush.msra.mxu0 %v684
        %690 = vmatpush.msra.mxu0 %v683
        %691 = vmatpush.msra.mxu0 %v682
        %692 = vmatpush.msra.mxu0 %v681
        %693 = vmatpush.msra.mxu0 %v680
        %694 = vmatpush.msra.mxu0 %v679
        %695 = vmatpush.msra.mxu0 %v678
        %696 = vmatpush.msra.mxu0 %v677
        %697 = vmatpush.msra.mxu0 %v676
        %698 = vmatpush.msra.mxu0 %v675
        %699 = vmatpush.msra.mxu0 %v674
        %700 = vmatpush.msra.mxu0 %v673
        %701 = vmatpush.msra.mxu0 %v672
        %702 = vmatpush.msra.mxu0 %v671
        %703 = vmatpush.msra.mxu0 %v670
        %704 = vmatpush.msra.mxu0 %v669
        %705 = vmatmul.f32.gmra.mxu0 %v666
        %v706 = vpop.f32.mrf.mxu0
        %v707 = vadd.f32 %v687, %v706
        %708 = vmatmul.f32.gmra.mxu0 %v667
        %v709 = vpop.f32.mrf.mxu0
        %v710 = vadd.f32 %v687, %v709
        %711 = vmatmul.f32.gmra.mxu0 %v668
        %v712 = vpop.f32.mrf.mxu0
        %v713 = vadd.f32 %v687, %v712
        %714 = vdwg.mxu0
        %715 = vmatpush.xpose.msra.mxu0 0.0
        %716 = vmatpush.xpose.msra.mxu0 0.0
        %717 = vmatpush.xpose.msra.mxu0 0.0
        %718 = vmatpush.xpose.msra.mxu0 0.0
        %719 = vmatpush.xpose.msra.mxu0 0.0
        %720 = vmatpush.xpose.msra.mxu0 0.0
        %721 = vmatpush.xpose.msra.mxu0 0.0
        %722 = vmatpush.xpose.msra.mxu0 0.0
        %723 = vmatpush.xpose.msra.mxu0 0.0
        %724 = vmatpush.xpose.msra.mxu0 0.0
        %725 = vmatpush.xpose.msra.mxu0 0.0
        %726 = vmatpush.xpose.msra.mxu0 0.0
        %727 = vmatpush.xpose.msra.mxu0 0.0
        %728 = vmatpush.xpose.msra.mxu0 %v713
        %729 = vmatpush.xpose.msra.mxu0 %v710
        %730 = vmatpush.xpose.msra.mxu0 %v707
        %731 = vmatmul.f32.gmra.mxu0 %v707
        %v732 = vpop.f32.mrf.mxu0
        %v733 = vadd.f32 0.0, %v732
        %734 = vmatmul.f32.gmra.mxu0 %v710
        %v735 = vpop.f32.mrf.mxu0
        %v736 = vadd.f32 0.0, %v735
        %737 = vmatmul.f32.gmra.mxu0 %v713
        %v738 = vpop.f32.mrf.mxu0
        %v739 = vadd.f32 0.0, %v738
        %740 = vdwg.mxu0
        %741 = vxpose.xlu0.b32.start [1/16] %v707, 128
        %742 = vxpose.xlu0.b32.cont [2/16] %v710, 128
        %743 = vxpose.xlu0.b32.cont [3/16] %v713, 128
        %744 = vxpose.xlu0.b32.cont [4/16] 0.0, 128
        %745 = vxpose.xlu0.b32.cont [5/16] 0.0, 128
        %746 = vxpose.xlu0.b32.cont [6/16] 0.0, 128
        %747 = vxpose.xlu0.b32.cont [7/16] 0.0, 128
        %748 = vxpose.xlu0.b32.cont [8/16] 0.0, 128
        %749 = vxpose.xlu0.b32.cont [9/16] 0.0, 128
        %750 = vxpose.xlu0.b32.cont [10/16] 0.0, 128
        %751 = vxpose.xlu0.b32.cont [11/16] 0.0, 128
        %752 = vxpose.xlu0.b32.cont [12/16] 0.0, 128
        %753 = vxpose.xlu0.b32.cont [13/16] 0.0, 128
        %754 = vxpose.xlu0.b32.cont [14/16] 0.0, 128
        %755 = vxpose.xlu0.b32.cont [15/16] 0.0, 128
        %756 = vxpose.xlu0.b32.end [16/16] 0.0, 128
        %v757 = vpop.trf.xlu0
        %v758 = vpop.trf.xlu0
        %v759 = vpop.trf.xlu0
        %v760 = vpop.trf.xlu0
        %v761 = vpop.trf.xlu0
        %v762 = vpop.trf.xlu0
        %v763 = vpop.trf.xlu0
        %v764 = vpop.trf.xlu0
        %v765 = vpop.trf.xlu0
        %v766 = vpop.trf.xlu0
        %v767 = vpop.trf.xlu0
        %v768 = vpop.trf.xlu0
        %v769 = vpop.trf.xlu0
        %v770 = vpop.trf.xlu0
        %v771 = vpop.trf.xlu0
        %v772 = vpop.trf.xlu0
        %v773 = vmul.f32 %v757, %v757
        %v774 = vmul.f32 %v758, %v758
        %v775 = vmul.f32 %v759, %v759
        %v776 = vmul.f32 %v760, %v760
        %v777 = vmul.f32 %v761, %v761
        %v778 = vmul.f32 %v762, %v762
        %v779 = vmul.f32 %v763, %v763
        %v780 = vmul.f32 %v764, %v764
        %v781 = vmul.f32 %v765, %v765
        %v782 = vmul.f32 %v766, %v766
        %v783 = vmul.f32 %v767, %v767
        %v784 = vmul.f32 %v768, %v768
        %v785 = vmul.f32 %v769, %v769
        %v786 = vmul.f32 %v770, %v770
        %v787 = vmul.f32 %v771, %v771
        %v788 = vmul.f32 %v772, %v772
        %vm789 = vcmask 195584
        %v790 = vsel %vm789, %v773, 0.0
        %v791 = vsel %vm789, %v774, 0.0
        %v792 = vadd.f32 %v790, %v791
        %v793 = vsel %vm789, %v775, 0.0
        %v794 = vadd.f32 %v792, %v793
        %v795 = vsel %vm789, %v776, 0.0
        %v796 = vadd.f32 %v794, %v795
        %v797 = vsel %vm789, %v777, 0.0
        %v798 = vadd.f32 %v796, %v797
        %v799 = vsel %vm789, %v778, 0.0
        %v800 = vadd.f32 %v798, %v799
        %v801 = vsel %vm789, %v779, 0.0
        %v802 = vadd.f32 %v800, %v801
        %v803 = vsel %vm789, %v780, 0.0
        %v804 = vadd.f32 %v802, %v803
        %v805 = vsel %vm789, %v781, 0.0
        %v806 = vadd.f32 %v804, %v805
        %v807 = vsel %vm789, %v782, 0.0
        %v808 = vadd.f32 %v806, %v807
        %v809 = vsel %vm789, %v783, 0.0
        %v810 = vadd.f32 %v808, %v809
        %v811 = vsel %vm789, %v784, 0.0
        %v812 = vadd.f32 %v810, %v811
        %v813 = vsel %vm789, %v785, 0.0
        %v814 = vadd.f32 %v812, %v813
        %v815 = vsel %vm789, %v786, 0.0
        %v816 = vadd.f32 %v814, %v815
        %v817 = vsel %vm789, %v787, 0.0
        %v818 = vadd.f32 %v816, %v817
        %v819 = vsel %vm789, %v788, 0.0
        %v820 = vadd.f32 %v818, %v819
        %v821 = vrot.slane %v820, 4
        %v822 = vadd.f32 %v820, %v821
        %v823 = vrot.slane %v822, 2
        %v824 = vadd.f32 %v822, %v823
        %v825 = vrot.slane %v824, 1
        %v826 = vadd.f32 %v824, %v825
        %v827 = vmul.f32 %v733, 2.0
        %v828 = vmul.f32 %v736, 2.0
        %v829 = vmul.f32 %v739, 2.0
        %v830 = vsub.f32 %v827, %v826
        %v831 = vsub.f32 %v828, %v826
        %v832 = vsub.f32 %v829, %v826
        %v833 = vlaneseq
        %v834 = vand.u32 %v833, 127
        %v835 = vcvt.s32.f32 %v834
        %v836 = vmul.f32 %v835, 1e-06
        %v837 = vsub.f32 %v830, %v836
        %v838 = vsub.f32 %v831, %v836
        %v839 = vsub.f32 %v832, %v836
        %v840 = vsel %vm789, %v837, -inf
        %841 = vmax.xlane.f32.xlu0 %v840
        %v842 = vpop.xlane.xlu0 %841
        %v843 = vsel %vm789, %v838, -inf
        %844 = vmax.xlane.f32.xlu0 %v843
        %v845 = vpop.xlane.xlu0 %844
        %v846 = vsel %vm789, %v839, -inf
        %847 = vmax.xlane.f32.xlu0 %v846
        %v848 = vpop.xlane.xlu0 %847
        %vm849 = vcmp.ge.f32.partialorder %v837, %v842
        %vm850 = vcmp.ge.f32.partialorder %v838, %v845
        %vm851 = vcmp.ge.f32.partialorder %v839, %v848
        %v852 = vsel %vm849, 1, 0
        %v853 = vsel %vm850, 1, 0
        %v854 = vsel %vm851, 1, 0
        %v855 = vcvt.s32.f32 %v852
        %v856 = vcvt.s32.f32 %v853
        %v857 = vcvt.s32.f32 %v854
        %v859 = vsel %vm789, %v855, 0
        %v862 = vsel %vm789, %v856, 0
        %v865 = vsel %vm789, %v857, 0
        %867 = vmatpush.msra.mxu0 0.0
        %868 = vmatpush.msra.mxu0 0.0
        %869 = vmatpush.msra.mxu0 0.0
        %870 = vmatpush.msra.mxu0 0.0
        %871 = vmatpush.msra.mxu0 0.0
        %872 = vmatpush.msra.mxu0 0.0
        %873 = vmatpush.msra.mxu0 0.0
        %874 = vmatpush.msra.mxu0 0.0
        %875 = vmatpush.msra.mxu0 0.0
        %876 = vmatpush.msra.mxu0 0.0
        %877 = vmatpush.msra.mxu0 0.0
        %878 = vmatpush.msra.mxu0 0.0
        %879 = vmatpush.msra.mxu0 0.0
        %880 = vmatpush.msra.mxu0 %v713
        %881 = vmatpush.msra.mxu0 %v710
        %882 = vmatpush.msra.mxu0 %v707
        %883 = vmatmul.f32.gmra.mxu0 %v859
        %v884 = vpop.f32.mrf.mxu0
        %v885 = vadd.f32 0.0, %v884
        %886 = vmatmul.f32.gmra.mxu0 %v862
        %v887 = vpop.f32.mrf.mxu0
        %v888 = vadd.f32 0.0, %v887
        %889 = vmatmul.f32.gmra.mxu0 %v865
        %v890 = vpop.f32.mrf.mxu0
        %v891 = vadd.f32 0.0, %v890
        %892 = vdwg.mxu0
        %v893 = vsel %vm849, -1e+30, %v837
        %v894 = vsel %vm850, -1e+30, %v838
        %v895 = vsel %vm851, -1e+30, %v839
        %v896 = vsel %vm789, %v893, -inf
        %897 = vmax.xlane.f32.xlu0 %v896
        %v898 = vpop.xlane.xlu0 %897
        %v899 = vsel %vm789, %v894, -inf
        %900 = vmax.xlane.f32.xlu0 %v899
        %v901 = vpop.xlane.xlu0 %900
        %v902 = vsel %vm789, %v895, -inf
        %903 = vmax.xlane.f32.xlu0 %v902
        %v904 = vpop.xlane.xlu0 %903
        %vm905 = vcmp.ge.f32.partialorder %v893, %v898
        %vm906 = vcmp.ge.f32.partialorder %v894, %v901
        %vm907 = vcmp.ge.f32.partialorder %v895, %v904
        %v908 = vsel %vm905, 1, 0
        %v909 = vsel %vm906, 1, 0
        %v910 = vsel %vm907, 1, 0
        %v911 = vcvt.s32.f32 %v908
        %v912 = vcvt.s32.f32 %v909
        %v913 = vcvt.s32.f32 %v910
        %v915 = vsel %vm789, %v911, 0
        %v918 = vsel %vm789, %v912, 0
        %v921 = vsel %vm789, %v913, 0
        %923 = vmatpush.msra.mxu0 0.0
        %924 = vmatpush.msra.mxu0 0.0
        %925 = vmatpush.msra.mxu0 0.0
        %926 = vmatpush.msra.mxu0 0.0
        %927 = vmatpush.msra.mxu0 0.0
        %928 = vmatpush.msra.mxu0 0.0
        %929 = vmatpush.msra.mxu0 0.0
        %930 = vmatpush.msra.mxu0 0.0
        %931 = vmatpush.msra.mxu0 0.0
        %932 = vmatpush.msra.mxu0 0.0
        %933 = vmatpush.msra.mxu0 0.0
        %934 = vmatpush.msra.mxu0 0.0
        %935 = vmatpush.msra.mxu0 0.0
        %936 = vmatpush.msra.mxu0 %v713
        %937 = vmatpush.msra.mxu0 %v710
        %938 = vmatpush.msra.mxu0 %v707
        %939 = vmatmul.f32.gmra.mxu0 %v915
        %v940 = vpop.f32.mrf.mxu0
        %v941 = vadd.f32 0.0, %v940
        %942 = vmatmul.f32.gmra.mxu0 %v918
        %v943 = vpop.f32.mrf.mxu0
        %v944 = vadd.f32 0.0, %v943
        %945 = vmatmul.f32.gmra.mxu0 %v921
        %v946 = vpop.f32.mrf.mxu0
        %v947 = vadd.f32 0.0, %v946
        %948 = vdwg.mxu0
        %v949 = vmax.f32 %v885, %v941
        %v950 = vmax.f32 %v888, %v944
        %v951 = vmax.f32 %v891, %v947
        %v952 = vsel %vm905, -1e+30, %v893
        %v953 = vsel %vm906, -1e+30, %v894
        %v954 = vsel %vm907, -1e+30, %v895
        %v955 = vsel %vm789, %v952, -inf
        %956 = vmax.xlane.f32.xlu0 %v955
        %v957 = vpop.xlane.xlu0 %956
        %v958 = vsel %vm789, %v953, -inf
        %959 = vmax.xlane.f32.xlu0 %v958
        %v960 = vpop.xlane.xlu0 %959
        %v961 = vsel %vm789, %v954, -inf
        %962 = vmax.xlane.f32.xlu0 %v961
        %v963 = vpop.xlane.xlu0 %962
        %vm964 = vcmp.ge.f32.partialorder %v952, %v957
        %vm965 = vcmp.ge.f32.partialorder %v953, %v960
        %vm966 = vcmp.ge.f32.partialorder %v954, %v963
        %v967 = vsel %vm964, 1, 0
        %v968 = vsel %vm965, 1, 0
        %v969 = vsel %vm966, 1, 0
        %v970 = vcvt.s32.f32 %v967
        %v971 = vcvt.s32.f32 %v968
        %v972 = vcvt.s32.f32 %v969
        %v974 = vsel %vm789, %v970, 0
        %v977 = vsel %vm789, %v971, 0
        %v980 = vsel %vm789, %v972, 0
        %982 = vmatpush.msra.mxu0 0.0
        %983 = vmatpush.msra.mxu0 0.0
        %984 = vmatpush.msra.mxu0 0.0
        %985 = vmatpush.msra.mxu0 0.0
        %986 = vmatpush.msra.mxu0 0.0
        %987 = vmatpush.msra.mxu0 0.0
        %988 = vmatpush.msra.mxu0 0.0
        %989 = vmatpush.msra.mxu0 0.0
        %990 = vmatpush.msra.mxu0 0.0
        %991 = vmatpush.msra.mxu0 0.0
        %992 = vmatpush.msra.mxu0 0.0
        %993 = vmatpush.msra.mxu0 0.0
        %994 = vmatpush.msra.mxu0 0.0
        %995 = vmatpush.msra.mxu0 %v713
        %996 = vmatpush.msra.mxu0 %v710
        %997 = vmatpush.msra.mxu0 %v707
        %998 = vmatmul.f32.gmra.mxu0 %v974
        %v999 = vpop.f32.mrf.mxu0
        %v1000 = vadd.f32 0.0, %v999
        %1001 = vmatmul.f32.gmra.mxu0 %v977
        %v1002 = vpop.f32.mrf.mxu0
        %v1003 = vadd.f32 0.0, %v1002
        %1004 = vmatmul.f32.gmra.mxu0 %v980
        %v1005 = vpop.f32.mrf.mxu0
        %v1006 = vadd.f32 0.0, %v1005
        %1007 = vdwg.mxu0
        %v1008 = vmax.f32 %v949, %v1000
        %v1009 = vmax.f32 %v950, %v1003
        %v1010 = vmax.f32 %v951, %v1006
        %v1011 = vsel %vm964, -1e+30, %v952
        %v1012 = vsel %vm965, -1e+30, %v953
        %v1013 = vsel %vm966, -1e+30, %v954
        %v1014 = vsel %vm789, %v1011, -inf
        %1015 = vmax.xlane.f32.xlu0 %v1014
        %v1016 = vpop.xlane.xlu0 %1015
        %v1017 = vsel %vm789, %v1012, -inf
        %1018 = vmax.xlane.f32.xlu0 %v1017
        %v1019 = vpop.xlane.xlu0 %1018
        %v1020 = vsel %vm789, %v1013, -inf
        %1021 = vmax.xlane.f32.xlu0 %v1020
        %v1022 = vpop.xlane.xlu0 %1021
        %vm1023 = vcmp.ge.f32.partialorder %v1011, %v1016
        %vm1024 = vcmp.ge.f32.partialorder %v1012, %v1019
        %vm1025 = vcmp.ge.f32.partialorder %v1013, %v1022
        %v1026 = vsel %vm1023, 1, 0
        %v1027 = vsel %vm1024, 1, 0
        %v1028 = vsel %vm1025, 1, 0
        %v1029 = vcvt.s32.f32 %v1026
        %v1030 = vcvt.s32.f32 %v1027
        %v1031 = vcvt.s32.f32 %v1028
        %v1033 = vsel %vm789, %v1029, 0
        %v1036 = vsel %vm789, %v1030, 0
        %v1039 = vsel %vm789, %v1031, 0
        %1041 = vmatpush.msra.mxu0 0.0
        %1042 = vmatpush.msra.mxu0 0.0
        %1043 = vmatpush.msra.mxu0 0.0
        %1044 = vmatpush.msra.mxu0 0.0
        %1045 = vmatpush.msra.mxu0 0.0
        %1046 = vmatpush.msra.mxu0 0.0
        %1047 = vmatpush.msra.mxu0 0.0
        %1048 = vmatpush.msra.mxu0 0.0
        %1049 = vmatpush.msra.mxu0 0.0
        %1050 = vmatpush.msra.mxu0 0.0
        %1051 = vmatpush.msra.mxu0 0.0
        %1052 = vmatpush.msra.mxu0 0.0
        %1053 = vmatpush.msra.mxu0 0.0
        %1054 = vmatpush.msra.mxu0 %v713
        %1055 = vmatpush.msra.mxu0 %v710
        %1056 = vmatpush.msra.mxu0 %v707
        %1057 = vmatmul.f32.gmra.mxu0 %v1033
        %v1058 = vpop.f32.mrf.mxu0
        %v1059 = vadd.f32 0.0, %v1058
        %1060 = vmatmul.f32.gmra.mxu0 %v1036
        %v1061 = vpop.f32.mrf.mxu0
        %v1062 = vadd.f32 0.0, %v1061
        %1063 = vmatmul.f32.gmra.mxu0 %v1039
        %v1064 = vpop.f32.mrf.mxu0
        %v1065 = vadd.f32 0.0, %v1064
        %1066 = vdwg.mxu0
        %v1067 = vmax.f32 %v1008, %v1059
        %v1068 = vmax.f32 %v1009, %v1062
        %v1069 = vmax.f32 %v1010, %v1065
        %v1070 = vsub.f32 %v1067, %v707
        %v1071 = vsub.f32 %v1068, %v710
        %v1072 = vsub.f32 %v1069, %v713
        %v1073 = vld [vmem:[#allocation8] sm:$0xff]
        %v1074 = vld [vmem:[#allocation8 + $0x8] sm:$0xff]
        %v1075 = vld [vmem:[#allocation8 + $0x10] sm:$0xff]
        %v1076 = vld [vmem:[#allocation8 + $0x18] sm:$0xff]
        %v1077 = vld [vmem:[#allocation8 + $0x20] sm:$0xff]
        %v1078 = vld [vmem:[#allocation8 + $0x28] sm:$0xff]
        %v1079 = vld [vmem:[#allocation8 + $0x30] sm:$0xff]
        %v1080 = vld [vmem:[#allocation8 + $0x38] sm:$0xff]
        %v1081 = vld [vmem:[#allocation8 + $0x40] sm:$0xff]
        %v1082 = vld [vmem:[#allocation8 + $0x48] sm:$0xff]
        %v1083 = vld [vmem:[#allocation8 + $0x50] sm:$0xff]
        %v1084 = vld [vmem:[#allocation8 + $0x58] sm:$0xff]
        %v1085 = vld [vmem:[#allocation8 + $0x60] sm:$0xff]
        %v1086 = vld [vmem:[#allocation8 + $0x68] sm:$0xff]
        %v1087 = vld [vmem:[#allocation8 + $0x70] sm:$0xff]
        %v1088 = vld [vmem:[#allocation8 + $0x78] sm:$0xff]
        %v1089 = vld [vmem:[#allocation9] sm:$0xff]
        %v1090 = vld [vmem:[#allocation9 + $0x8] sm:$0xff]
        %v1091 = vld [vmem:[#allocation9 + $0x10] sm:$0xff]
        %v1092 = vld [vmem:[#allocation9 + $0x18] sm:$0xff]
        %v1093 = vld [vmem:[#allocation9 + $0x20] sm:$0xff]
        %v1094 = vld [vmem:[#allocation9 + $0x28] sm:$0xff]
        %v1095 = vld [vmem:[#allocation9 + $0x30] sm:$0xff]
        %v1096 = vld [vmem:[#allocation9 + $0x38] sm:$0xff]
        %v1097 = vld [vmem:[#allocation9 + $0x40] sm:$0xff]
        %v1098 = vld [vmem:[#allocation9 + $0x48] sm:$0xff]
        %v1099 = vld [vmem:[#allocation9 + $0x50] sm:$0xff]
        %v1100 = vld [vmem:[#allocation9 + $0x58] sm:$0xff]
        %v1101 = vld [vmem:[#allocation9 + $0x60] sm:$0xff]
        %v1102 = vld [vmem:[#allocation9 + $0x68] sm:$0xff]
        %v1103 = vld [vmem:[#allocation9 + $0x70] sm:$0xff]
        %v1104 = vld [vmem:[#allocation9 + $0x78] sm:$0xff]
        %1105 = vmatpush.msra.mxu0 %v1104
        %1106 = vmatpush.msra.mxu0 %v1103
        %1107 = vmatpush.msra.mxu0 %v1102
        %1108 = vmatpush.msra.mxu0 %v1101
        %1109 = vmatpush.msra.mxu0 %v1100
        %1110 = vmatpush.msra.mxu0 %v1099
        %1111 = vmatpush.msra.mxu0 %v1098
        %1112 = vmatpush.msra.mxu0 %v1097
        %1113 = vmatpush.msra.mxu0 %v1096
        %1114 = vmatpush.msra.mxu0 %v1095
        %1115 = vmatpush.msra.mxu0 %v1094
        %1116 = vmatpush.msra.mxu0 %v1093
        %1117 = vmatpush.msra.mxu0 %v1092
        %1118 = vmatpush.msra.mxu0 %v1091
        %1119 = vmatpush.msra.mxu0 %v1090
        %1120 = vmatpush.msra.mxu0 %v1089
        %1121 = vmatmul.f32.gmra.mxu0 %v1070
        %v1122 = vpop.f32.mrf.mxu0
        %v1123 = vadd.f32 0.0, %v1122
        %1124 = vmatmul.f32.gmra.mxu0 %v1071
        %v1125 = vpop.f32.mrf.mxu0
        %v1126 = vadd.f32 0.0, %v1125
        %1127 = vmatmul.f32.gmra.mxu0 %v1072
        %v1128 = vpop.f32.mrf.mxu0
        %v1129 = vadd.f32 0.0, %v1128
        %1130 = vdwg.mxu0
        %1131 = vmatpush.msra.mxu0 %v1088
        %1132 = vmatpush.msra.mxu0 %v1087
        %1133 = vmatpush.msra.mxu0 %v1086
        %1134 = vmatpush.msra.mxu0 %v1085
        %1135 = vmatpush.msra.mxu0 %v1084
        %1136 = vmatpush.msra.mxu0 %v1083
        %1137 = vmatpush.msra.mxu0 %v1082
        %1138 = vmatpush.msra.mxu0 %v1081
        %1139 = vmatpush.msra.mxu0 %v1080
        %1140 = vmatpush.msra.mxu0 %v1079
        %1141 = vmatpush.msra.mxu0 %v1078
        %1142 = vmatpush.msra.mxu0 %v1077
        %1143 = vmatpush.msra.mxu0 %v1076
        %1144 = vmatpush.msra.mxu0 %v1075
        %1145 = vmatpush.msra.mxu0 %v1074
        %1146 = vmatpush.msra.mxu0 %v1073
        %1147 = vmatmul.f32.gmra.mxu0 %v707
        %v1148 = vpop.f32.mrf.mxu0
        %v1149 = vadd.f32 %v1123, %v1148
        %1150 = vmatmul.f32.gmra.mxu0 %v710
        %v1151 = vpop.f32.mrf.mxu0
        %v1152 = vadd.f32 %v1126, %v1151
        %1153 = vmatmul.f32.gmra.mxu0 %v713
        %v1154 = vpop.f32.mrf.mxu0
        %v1155 = vadd.f32 %v1129, %v1154
        %1156 = vdwg.mxu0
        %v1157 = vld [vmem:[%s8] sm:$0x1]
        %v1159 = vperm.slane %v1157, 0
        %v1161 = vadd.f32 %v1149, %v1159
        %v1162 = vadd.f32 %v1152, %v1159
        %v1163 = vadd.f32 %v1155, %v1159
        %v1164 = vmul.f32 %v1161, %v1161
        %v1165 = vmul.f32 %v1162, %v1162
        %v1166 = vmul.f32 %v1163, %v1163
        %v1167 = vmul.f32 %v1161, %v1164
        %v1168 = vmul.f32 %v1162, %v1165
        %v1169 = vmul.f32 %v1163, %v1166
        %v1170 = vmul.f32 %v1167, 0.044715
        %v1171 = vmul.f32 %v1168, 0.044715
        %v1172 = vmul.f32 %v1169, 0.044715
        %v1173 = vadd.f32 %v1161, %v1170
        %v1174 = vadd.f32 %v1162, %v1171
        %v1175 = vadd.f32 %v1163, %v1172
        %v1176 = vmul.f32 %v1173, 0.7978846
        %v1177 = vmul.f32 %v1174, 0.7978846
        %v1178 = vmul.f32 %v1175, 0.7978846
        %v1179 = vtanh.pop %v1176
        %v1180 = vtanh.pop %v1177
        %v1181 = vtanh.pop %v1178
        %v1182 = vadd.f32 %v1179, 1.0
        %v1183 = vadd.f32 %v1180, 1.0
        %v1184 = vadd.f32 %v1181, 1.0
        %v1185 = vmul.f32 %v1182, 0.5
        %v1186 = vmul.f32 %v1183, 0.5
        %v1187 = vmul.f32 %v1184, 0.5
        %v1188 = vmul.f32 %v1161, %v1185
        %v1189 = vmul.f32 %v1162, %v1186
        %v1190 = vmul.f32 %v1163, %v1187
        %v1191 = vld [vmem:[#allocation11] sm:$0xff]
        %v1192 = vld [vmem:[#allocation11 + $0x8] sm:$0xff]
        %v1193 = vld [vmem:[#allocation11 + $0x10] sm:$0xff]
        %v1194 = vld [vmem:[#allocation11 + $0x18] sm:$0xff]
        %v1195 = vld [vmem:[#allocation11 + $0x20] sm:$0xff]
        %v1196 = vld [vmem:[#allocation11 + $0x28] sm:$0xff]
        %v1197 = vld [vmem:[#allocation11 + $0x30] sm:$0xff]
        %v1198 = vld [vmem:[#allocation11 + $0x38] sm:$0xff]
        %v1199 = vld [vmem:[#allocation11 + $0x40] sm:$0xff]
        %v1200 = vld [vmem:[#allocation11 + $0x48] sm:$0xff]
        %v1201 = vld [vmem:[#allocation11 + $0x50] sm:$0xff]
        %v1202 = vld [vmem:[#allocation11 + $0x58] sm:$0xff]
        %v1203 = vld [vmem:[#allocation11 + $0x60] sm:$0xff]
        %v1204 = vld [vmem:[#allocation11 + $0x68] sm:$0xff]
        %v1205 = vld [vmem:[#allocation11 + $0x70] sm:$0xff]
        %v1206 = vld [vmem:[#allocation11 + $0x78] sm:$0xff]
        %v1207 = vld [vmem:[%s10] sm:$0x1]
        %v1209 = vperm.slane %v1207, 0
        %1211 = vmatpush.msra.mxu0 %v1206
        %1212 = vmatpush.msra.mxu0 %v1205
        %1213 = vmatpush.msra.mxu0 %v1204
        %1214 = vmatpush.msra.mxu0 %v1203
        %1215 = vmatpush.msra.mxu0 %v1202
        %1216 = vmatpush.msra.mxu0 %v1201
        %1217 = vmatpush.msra.mxu0 %v1200
        %1218 = vmatpush.msra.mxu0 %v1199
        %1219 = vmatpush.msra.mxu0 %v1198
        %1220 = vmatpush.msra.mxu0 %v1197
        %1221 = vmatpush.msra.mxu0 %v1196
        %1222 = vmatpush.msra.mxu0 %v1195
        %1223 = vmatpush.msra.mxu0 %v1194
        %1224 = vmatpush.msra.mxu0 %v1193
        %1225 = vmatpush.msra.mxu0 %v1192
        %1226 = vmatpush.msra.mxu0 %v1191
        %1227 = vmatmul.f32.gmra.mxu0 %v1188
        %v1228 = vpop.f32.mrf.mxu0
        %v1229 = vadd.f32 %v1209, %v1228
        %1230 = vmatmul.f32.gmra.mxu0 %v1189
        %v1231 = vpop.f32.mrf.mxu0
        %v1232 = vadd.f32 %v1209, %v1231
        %1233 = vmatmul.f32.gmra.mxu0 %v1190
        %v1234 = vpop.f32.mrf.mxu0
        %v1235 = vadd.f32 %v1209, %v1234
        %1236 = vdwg.mxu0
        %v1237 = vadd.f32 %v1229, %v666
        %v1238 = vadd.f32 %v1232, %v667
        %v1239 = vadd.f32 %v1235, %v668
        %v1240 = vld [vmem:[%s11] sm:$0x3]
        %vm1241 = vcmask 23552
        %v1243 = vsel %vm1241, %v1240, 0
        %vm1245 = vcmask 1042432
        %v1247 = vsel %vm1245, %v1237, 0
        %1249 = vmatpush.msra.mxu0 0.0
        %1250 = vmatpush.msra.mxu0 0.0
        %1251 = vmatpush.msra.mxu0 0.0
        %1252 = vmatpush.msra.mxu0 0.0
        %1253 = vmatpush.msra.mxu0 0.0
        %1254 = vmatpush.msra.mxu0 0.0
        %1255 = vmatpush.msra.mxu0 0.0
        %1256 = vmatpush.msra.mxu0 0.0
        %1257 = vmatpush.msra.mxu0 0.0
        %1258 = vmatpush.msra.mxu0 0.0
        %1259 = vmatpush.msra.mxu0 0.0
        %1260 = vmatpush.msra.mxu0 0.0
        %1261 = vmatpush.msra.mxu0 0.0
        %1262 = vmatpush.msra.mxu0 0.0
        %1263 = vmatpush.msra.mxu0 0.0
        %1264 = vmatpush.msra.mxu0 %v1247
        %1265 = vmatmul.f32.gmra.mxu0 %v1243
        %v1266 = vpop.f32.mrf.mxu0
        %v1267 = vadd.f32 0.0, %v1266
        %1268 = vdwg.mxu0
        %1269 = vst [vmem:[#allocation2] sm:$0x3] %v1267
        %v1270 = vld [vmem:[%s11] sm:$0x3]
        %v1271 = vrot.slane %v1237, 3
        %v1273 = vsel %vm1241, %v1270, 0
        %v1275 = vsel %vm1245, %v1271, 0
        %1277 = vmatpush.msra.mxu0 0.0
        %1278 = vmatpush.msra.mxu0 0.0
        %1279 = vmatpush.msra.mxu0 0.0
        %1280 = vmatpush.msra.mxu0 0.0
        %1281 = vmatpush.msra.mxu0 0.0
        %1282 = vmatpush.msra.mxu0 0.0
        %1283 = vmatpush.msra.mxu0 0.0
        %1284 = vmatpush.msra.mxu0 0.0
        %1285 = vmatpush.msra.mxu0 0.0
        %1286 = vmatpush.msra.mxu0 0.0
        %1287 = vmatpush.msra.mxu0 0.0
        %1288 = vmatpush.msra.mxu0 0.0
        %1289 = vmatpush.msra.mxu0 0.0
        %1290 = vmatpush.msra.mxu0 0.0
        %1291 = vmatpush.msra.mxu0 0.0
        %1292 = vmatpush.msra.mxu0 %v1275
        %1293 = vmatmul.f32.gmra.mxu0 %v1273
        %v1294 = vpop.f32.mrf.mxu0
        %v1295 = vadd.f32 0.0, %v1294
        %1296 = vdwg.mxu0
        %1297 = vst [vmem:[#allocation2 + $0x2] sm:$0x3] %v1295
        %v1298 = vld [vmem:[%s11] sm:$0x3]
        %vm1300 = vcmask 1041408
        %v1301 = vrot.slane %v1237, 6
        %v1302 = vrot.slane %v1238, 6
        %v1303 = vsel %vm1300, %v1301, %v1302
        %v1305 = vsel %vm1241, %v1298, 0
        %v1307 = vsel %vm1245, %v1303, 0
        %1309 = vmatpush.msra.mxu0 0.0
        %1310 = vmatpush.msra.mxu0 0.0
        %1311 = vmatpush.msra.mxu0 0.0
        %1312 = vmatpush.msra.mxu0 0.0
        %1313 = vmatpush.msra.mxu0 0.0
        %1314 = vmatpush.msra.mxu0 0.0
        %1315 = vmatpush.msra.mxu0 0.0
        %1316 = vmatpush.msra.mxu0 0.0
        %1317 = vmatpush.msra.mxu0 0.0
        %1318 = vmatpush.msra.mxu0 0.0
        %1319 = vmatpush.msra.mxu0 0.0
        %1320 = vmatpush.msra.mxu0 0.0
        %1321 = vmatpush.msra.mxu0 0.0
        %1322 = vmatpush.msra.mxu0 0.0
        %1323 = vmatpush.msra.mxu0 0.0
        %1324 = vmatpush.msra.mxu0 %v1307
        %1325 = vmatmul.f32.gmra.mxu0 %v1305
        %v1326 = vpop.f32.mrf.mxu0
        %v1327 = vadd.f32 0.0, %v1326
        %1328 = vdwg.mxu0
        %1329 = vst [vmem:[#allocation2 + $0x4] sm:$0x3] %v1327
        %v1330 = vld [vmem:[%s11] sm:$0x3]
        %v1331 = vrot.slane %v1238, 1
        %v1333 = vsel %vm1241, %v1330, 0
        %v1335 = vsel %vm1245, %v1331, 0
        %1337 = vmatpush.msra.mxu0 0.0
        %1338 = vmatpush.msra.mxu0 0.0
        %1339 = vmatpush.msra.mxu0 0.0
        %1340 = vmatpush.msra.mxu0 0.0
        %1341 = vmatpush.msra.mxu0 0.0
        %1342 = vmatpush.msra.mxu0 0.0
        %1343 = vmatpush.msra.mxu0 0.0
        %1344 = vmatpush.msra.mxu0 0.0
        %1345 = vmatpush.msra.mxu0 0.0
        %1346 = vmatpush.msra.mxu0 0.0
        %1347 = vmatpush.msra.mxu0 0.0
        %1348 = vmatpush.msra.mxu0 0.0
        %1349 = vmatpush.msra.mxu0 0.0
        %1350 = vmatpush.msra.mxu0 0.0
        %1351 = vmatpush.msra.mxu0 0.0
        %1352 = vmatpush.msra.mxu0 %v1335
        %1353 = vmatmul.f32.gmra.mxu0 %v1333
        %v1354 = vpop.f32.mrf.mxu0
        %v1355 = vadd.f32 0.0, %v1354
        %1356 = vdwg.mxu0
        %1357 = vst [vmem:[#allocation2 + $0x6] sm:$0x3] %v1355
        %v1358 = vld [vmem:[%s11] sm:$0x3]
        %v1359 = vrot.slane %v1238, 4
        %v1361 = vsel %vm1241, %v1358, 0
        %v1363 = vsel %vm1245, %v1359, 0
        %1365 = vmatpush.msra.mxu0 0.0
        %1366 = vmatpush.msra.mxu0 0.0
        %1367 = vmatpush.msra.mxu0 0.0
        %1368 = vmatpush.msra.mxu0 0.0
        %1369 = vmatpush.msra.mxu0 0.0
        %1370 = vmatpush.msra.mxu0 0.0
        %1371 = vmatpush.msra.mxu0 0.0
        %1372 = vmatpush.msra.mxu0 0.0
        %1373 = vmatpush.msra.mxu0 0.0
        %1374 = vmatpush.msra.mxu0 0.0
        %1375 = vmatpush.msra.mxu0 0.0
        %1376 = vmatpush.msra.mxu0 0.0
        %1377 = vmatpush.msra.mxu0 0.0
        %1378 = vmatpush.msra.mxu0 0.0
        %1379 = vmatpush.msra.mxu0 0.0
        %1380 = vmatpush.msra.mxu0 %v1363
        %1381 = vmatmul.f32.gmra.mxu0 %v1361
        %v1382 = vpop.f32.mrf.mxu0
        %v1383 = vadd.f32 0.0, %v1382
        %1384 = vdwg.mxu0
        %1385 = vst [vmem:[#allocation2 + $0x8] sm:$0x3] %v1383
        %v1386 = vld [vmem:[%s11] sm:$0x3]
        %vm1388 = vcmask 1040384
        %v1389 = vrot.slane %v1238, 7
        %v1390 = vrot.slane %v1239, 7
        %v1391 = vsel %vm1388, %v1389, %v1390
        %v1393 = vsel %vm1241, %v1386, 0
        %v1395 = vsel %vm1245, %v1391, 0
        %1397 = vmatpush.msra.mxu0 0.0
        %1398 = vmatpush.msra.mxu0 0.0
        %1399 = vmatpush.msra.mxu0 0.0
        %1400 = vmatpush.msra.mxu0 0.0
        %1401 = vmatpush.msra.mxu0 0.0
        %1402 = vmatpush.msra.mxu0 0.0
        %1403 = vmatpush.msra.mxu0 0.0
        %1404 = vmatpush.msra.mxu0 0.0
        %1405 = vmatpush.msra.mxu0 0.0
        %1406 = vmatpush.msra.mxu0 0.0
        %1407 = vmatpush.msra.mxu0 0.0
        %1408 = vmatpush.msra.mxu0 0.0
        %1409 = vmatpush.msra.mxu0 0.0
        %1410 = vmatpush.msra.mxu0 0.0
        %1411 = vmatpush.msra.mxu0 0.0
        %1412 = vmatpush.msra.mxu0 %v1395
        %1413 = vmatmul.f32.gmra.mxu0 %v1393
        %v1414 = vpop.f32.mrf.mxu0
        %v1415 = vadd.f32 0.0, %v1414
        %1416 = vdwg.mxu0
        %1417 = vst [vmem:[#allocation2 + $0xa] sm:$0x3] %v1415
        %v1418 = vld [vmem:[%s11] sm:$0x3]
        %v1419 = vrot.slane %v1239, 2
        %v1421 = vsel %vm1241, %v1418, 0
        %v1423 = vsel %vm1245, %v1419, 0
        %1425 = vmatpush.msra.mxu0 0.0
        %1426 = vmatpush.msra.mxu0 0.0
        %1427 = vmatpush.msra.mxu0 0.0
        %1428 = vmatpush.msra.mxu0 0.0
        %1429 = vmatpush.msra.mxu0 0.0
        %1430 = vmatpush.msra.mxu0 0.0
        %1431 = vmatpush.msra.mxu0 0.0
        %1432 = vmatpush.msra.mxu0 0.0
        %1433 = vmatpush.msra.mxu0 0.0
        %1434 = vmatpush.msra.mxu0 0.0
        %1435 = vmatpush.msra.mxu0 0.0
        %1436 = vmatpush.msra.mxu0 0.0
        %1437 = vmatpush.msra.mxu0 0.0
        %1438 = vmatpush.msra.mxu0 0.0
        %1439 = vmatpush.msra.mxu0 0.0
        %1440 = vmatpush.msra.mxu0 %v1423
        %1441 = vmatmul.f32.gmra.mxu0 %v1421
        %v1442 = vpop.f32.mrf.mxu0
        %v1443 = vadd.f32 0.0, %v1442
        %1444 = vdwg.mxu0
        %1445 = vst [vmem:[#allocation2 + $0xc] sm:$0x3] %v1443
        %v1446 = vld [vmem:[%s11] sm:$0x3]
        %v1447 = vrot.slane %v1239, 5
        %v1449 = vsel %vm1241, %v1446, 0
        %v1451 = vsel %vm1245, %v1447, 0
        %1453 = vmatpush.msra.mxu0 0.0
        %1454 = vmatpush.msra.mxu0 0.0
        %1455 = vmatpush.msra.mxu0 0.0
        %1456 = vmatpush.msra.mxu0 0.0
        %1457 = vmatpush.msra.mxu0 0.0
        %1458 = vmatpush.msra.mxu0 0.0
        %1459 = vmatpush.msra.mxu0 0.0
        %1460 = vmatpush.msra.mxu0 0.0
        %1461 = vmatpush.msra.mxu0 0.0
        %1462 = vmatpush.msra.mxu0 0.0
        %1463 = vmatpush.msra.mxu0 0.0
        %1464 = vmatpush.msra.mxu0 0.0
        %1465 = vmatpush.msra.mxu0 0.0
        %1466 = vmatpush.msra.mxu0 0.0
        %1467 = vmatpush.msra.mxu0 0.0
        %1468 = vmatpush.msra.mxu0 %v1451
        %1469 = vmatmul.f32.gmra.mxu0 %v1449
        %v1470 = vpop.f32.mrf.mxu0
        %v1471 = vadd.f32 0.0, %v1470
        %1472 = vdwg.mxu0
        %1473 = vst [vmem:[#allocation2 + $0xe] sm:$0x3] %v1471
        %v1474 = vld [vmem:[#allocation2] sm:$0xff]
        %v1475 = vld [vmem:[#allocation2 + $0x8] sm:$0xff]
        %v1476 = vld [vmem:[%s12] sm:$0xff]
        %v1477 = vld [vmem:[%s12 + $0x8] sm:$0xff]
        %1479 = vset.pattern.permute.xlu0 0
        %1480 = vperm.xlu0 %1479, %v1476
        %v1481 = vpop.permute.xlu0 %1480
        %1484 = vset.pattern.permute.xlu0 0
        %1485 = vperm.xlu0 %1484, %v1477
        %v1486 = vpop.permute.xlu0 %1485
        %v1488 = vadd.f32 %v1474, %v1481
        %v1489 = vadd.f32 %v1475, %v1486
        %vm1490 = vcmp.lt.s32.totalorder %v834, 3
        %v1491 = vsel %vm1490, %v1488, -1e+30
        %v1492 = vsel %vm1490, %v1489, -1e+30
        %1493 = vmax.xlane.f32.xlu0 %v1491
        %v1494 = vpop.xlane.xlu0 %1493
        %1495 = vmax.xlane.f32.xlu0 %v1492
        %v1496 = vpop.xlane.xlu0 %1495
        %v1497 = vsub.f32 %v1491, %v1494
        %v1498 = vsub.f32 %v1492, %v1496
        %v1499 = vmul.f32 %v1497, 1.442695
        %v1500 = vpow.pop %v1499
        %v1501 = vmul.f32 %v1498, 1.442695
        %v1502 = vpow.pop %v1501
        %1503 = vadd.xlane.f32.xlu0 %v1500
        %v1504 = vpop.xlane.xlu0 %1503
        %1505 = vadd.xlane.f32.xlu0 %v1502
        %v1506 = vpop.xlane.xlu0 %1505
        %v1507 = vlog2.pop %v1504
        %v1508 = vmul.f32 %v1507, 0.6931472
        %v1509 = vlog2.pop %v1506
        %v1510 = vmul.f32 %v1509, 0.6931472
        %v1511 = vadd.f32 %v1508, %v1494
        %v1512 = vadd.f32 %v1510, %v1496
        %v1513 = vsub.f32 %v1491, %v1511
        %v1514 = vsub.f32 %v1492, %v1512
        %1515 = vst [vmem:[%s526] sm:$0xff] %v1513
        %1516 = vst [vmem:[%s526 + $0x8] sm:$0xff] %v1514
        %s1517 = sand.u32 %s318, 1
        %s1518 = scalar_lea.sflag [#allocation5], %s1517
        %s1519 = sand.u32 %s318, 1
        %s1520 = smul.addr %s1519, 16
        %s1521 = scalar_lea.vmem [#allocation12], %s1520
        // Predicated region
        $region93: #{tpu_custom_call.1} parent=71 // pred_check
          %p1522 = pneg %p328
        $region94: #{tpu_custom_call.1} parent=71 // pred_check_branch
          %1524 = sbr.rel (%p1522) target = $region96
        $region95: #{tpu_custom_call.1} parent=71 // pred_region
          %1526 = vsyncadd %s1518, 0
          %s1527 = smul.addr %s32, 2
          %s1528 = smul.addr %s1527, 8
          %s1529 = scalar_lea.hbm %s13, %s1528
          %s1530 = sshll.u32 %s1521, 4
          %s1531 = int_to_ptr.vmem [resolvable:$true] %s1530
          %s1532 = sshll.u32 %s1529, 4
          %s1533 = int_to_ptr.hbm [resolvable:$true] %s1532
          %1538 = dma.vmem_to_hbm [thread:$0]  %s1531, 256, %s1533, %s1518, 128, 128, 8
        $region96: #{tpu_custom_call.1} parent=71 // pred_fallthru
          _
      $region72: #{tpu_custom_call.1} parent=5 // pred_fallthru
        _
      %p1539 = scmp.le.s32.totalorder 2, %s27
      // Predicated region
      $region97: #{tpu_custom_call.1} parent=5 // pred_check
        %p1540 = pneg %p1539
      $region98: #{tpu_custom_call.1} parent=5 // pred_check_branch
        %1542 = sbr.rel (%p1540) target = $region100
      $region99: #{tpu_custom_call.1} parent=5 // pred_region
        %s1543 = ssub.s32 %s27, 2
        // Predicated region
        $region101: #{tpu_custom_call.1} parent=99 // pred_check
          %p1544 = pneg %p334
        $region102: #{tpu_custom_call.1} parent=99 // pred_check_branch
          %1546 = sbr.rel (%p1544) target = $region104
        $region103: #{tpu_custom_call.1} parent=99 // pred_region
          %s1547 = sand.u32 %s319, 1
          %s1548 = scalar_lea.sflag [#allocation5], %s1547
          %s1549 = sand.u32 %s319, 1
          %s1550 = smul.addr %s1549, 16
          %s1551 = scalar_lea.vmem [#allocation12], %s1550
          %1553 = dma.done %s1548, 256
        $region104: #{tpu_custom_call.1} parent=99 // pred_fallthru
          _
      $region100: #{tpu_custom_call.1} parent=5 // pred_fallthru
        _
    $region6: #{tpu_custom_call.1} parent=1 // loop_footer
      %s31 = sadd.s32 1, %s27
    $region7: #{tpu_custom_call.1} parent=1 // loop_footer_branch
      %26 = sbr.rel target = $region3
    $region8: #{tpu_custom_call.1} parent=1 // loop_exit
      _
    %1554 = vsyncpa [#allocation4], 1
    %s1555 = scalar_lea.sflag [#allocation4], 1
    %1556 = vsyncpa %s1555, 1
    %1557 = vsyncpa [#allocation7], 1
    %1558 = vsyncpa [#allocation10], 1
    %1559 = vsyncpa [#allocation5], 1
    %s1560 = scalar_lea.sflag [#allocation5], 1
    %1561 = vsyncpa %s1560, 1

</llo_original>
